<compile_context>
chip_gen: v5e
topology: v5e:2x2
jax: 0.10.0
libtpu: 0.0.40
codegen_flags: <defaults>
</compile_context>

<pallas_src>
import functools

import jax
import jax.numpy as jnp
from jax.experimental import pallas as pl
from jax.experimental.pallas import tpu as pltpu


def _layer_norm(x, gamma, beta, ln_eps=1e-5):
    mu = jnp.mean(x, axis=-1, keepdims=True)
    var = jnp.mean(jnp.square(x - mu), axis=-1, keepdims=True)
    return (x - mu) * jax.lax.rsqrt(var + ln_eps) * gamma + beta


def _slot_attention_kernel(
    x_ref, slots_emb_ref,
    ln_pack_ref,                         # (6, D): in_g,in_b, s_g,s_b, ff_g,ff_b
    wkv_ref, bkv_ref,                    # (D, 2D), (1, 2D) fused K/V projection
    wq_ref, bq_ref,                      # 1/sqrt(D) pre-folded
    gru_wcat_ref, gru_bsum_ref,          # (2D, 3D), (1, 3D)  [wih;whh], bih+bhh
    gru_whn_ref, gru_bhn_ref,            # (D, D), (1, D)     n-gate hidden part
    mlp_w1_ref, mlp_b1_ref, mlp_w2_ref, mlp_b2_ref,
    out_ref,
    *, iters, eps, d, n, n_s, block_b, mxu_dtype,
):
    bb = block_b
    f32 = jnp.float32
    rows_s = bb * n_s

    # ---- hoisted, loop-invariant reads + MXU-operand casts -------------------
    ln_in_g = ln_pack_ref[0:1, :]; ln_in_b = ln_pack_ref[1:2, :]
    ln_s_g = ln_pack_ref[2:3, :]; ln_s_b = ln_pack_ref[3:4, :]
    ln_ff_g = ln_pack_ref[4:5, :]; ln_ff_b = ln_pack_ref[5:6, :]

    wq = wq_ref[...].astype(mxu_dtype)
    gru_wcat = gru_wcat_ref[...].astype(mxu_dtype)
    gru_whn = gru_whn_ref[...].astype(mxu_dtype)
    mlp_w1 = mlp_w1_ref[...].astype(mxu_dtype)
    mlp_w2 = mlp_w2_ref[...].astype(mxu_dtype)

    bq = bq_ref[...]                 # (1, D)  -- broadcast at point of use
    gru_bsum = gru_bsum_ref[...]     # (1, 3D)
    gru_bhn = gru_bhn_ref[...]       # (1, D)
    mlp_b1 = mlp_b1_ref[...]         # (1, HID)
    mlp_b2 = mlp_b2_ref[...]         # (1, D)

    # ---- prologue: LayerNorm(x) + fused K/V projection (once per block) ------
    x = x_ref[...].astype(f32).reshape(bb * n, d)                  # (BB*N, D)
    xin = _layer_norm(x, ln_in_g, ln_in_b)
    kv = jnp.dot(xin.astype(mxu_dtype), wkv_ref[...].astype(mxu_dtype),
                 preferred_element_type=f32) + bkv_ref[...]        # (BB*N, 2D)
    k3 = kv[:, :d].reshape(bb, n, d).astype(mxu_dtype)             # loop-invariant
    v3 = kv[:, d:].reshape(bb, n, d).astype(mxu_dtype)

    # initial slots: shared embedding table tiled across the batch block
    slots = jnp.tile(slots_emb_ref[...].astype(f32), (bb, 1))      # (BB*S, D)

    # TODO(synk): switch to lax.fori_loop(..., unroll=True) if iters grows
    # beyond 3 or block_b is pushed to the VMEM ceiling (bounds live ranges).
    for _ in range(iters):
        slots_prev = slots
        s_n = _layer_norm(slots, ln_s_g, ln_s_b)
        q3 = (jnp.dot(s_n.astype(mxu_dtype), wq, preferred_element_type=f32)
              + bq).reshape(bb, n_s, d)

        # attention: contract last dims directly (no k transpose materialized)
        dots = jnp.einsum('bid,bjd->bij', q3.astype(mxu_dtype), k3,
                          preferred_element_type=f32)              # (BB, S, N)
        # explicit softmax over the SLOT axis; both normalizations on the EUP
        m = jnp.max(dots, axis=1, keepdims=True)
        e = jnp.exp(dots - m)
        attn = e * pl.reciprocal(jnp.sum(e, axis=1, keepdims=True),
                                 approx=False) + eps
        attn = attn * pl.reciprocal(jnp.sum(attn, axis=-1, keepdims=True),
                                    approx=False)
        updates = jnp.einsum('bij,bjd->bid', attn.astype(mxu_dtype), v3,
                             preferred_element_type=f32).reshape(rows_s, d)

        # fused GRUCell (PyTorch gate ordering r, z, n):
        #   g = [updates, slots_prev] @ [wih; whh] + (bih + bhh)
        #   n = tanh(g_n + (r - 1) * (slots_prev @ whh_n + bhh_n))
        lhs = jnp.concatenate([updates, slots_prev], axis=-1)      # (rows, 2D)
        g = jnp.dot(lhs.astype(mxu_dtype), gru_wcat,
                    preferred_element_type=f32) + gru_bsum          # (rows, 3D)
        ghn = jnp.dot(slots_prev.astype(mxu_dtype), gru_whn,
                      preferred_element_type=f32) + gru_bhn          # (rows, D)
        r = jax.nn.sigmoid(g[:, 0:d])
        z = jax.nn.sigmoid(g[:, d:2 * d])
        n_g = jnp.tanh(g[:, 2 * d:3 * d] + (r - 1.0) * ghn)
        slots = (1.0 - z) * n_g + z * slots_prev

        # slots = slots + MLP(LayerNorm(slots))
        s_ff = _layer_norm(slots, ln_ff_g, ln_ff_b)
        h = jnp.maximum(jnp.dot(s_ff.astype(mxu_dtype), mlp_w1,
                                preferred_element_type=f32) + mlp_b1, 0.0)
        slots = slots + jnp.dot(h.astype(mxu_dtype), mlp_w2,
                                preferred_element_type=f32) + mlp_b2

    # TODO(synk): a lane-dense (block_b, S*D) output slab would avoid masked
    # stores at D<128; skipped since output bytes are tiny (not output-bound).
    out_ref[...] = slots.reshape(bb, n_s, d).astype(out_ref.dtype)


@functools.lru_cache(maxsize=1)
def _vmem_config():
    """Per-generation VMEM sizing: (block_b budget, compiler vmem_limit_bytes)."""
    cap = 64 << 20                       # conservative fallback = v7x physical
    try:
        c = int(pltpu.get_tpu_info().vmem_capacity_bytes)
        if c >= (32 << 20):
            cap = c
    except Exception:
        pass
    limit = min((3 * cap) // 4, cap - (8 << 20))   # leave pipeline headroom
    budget = cap // 2
    return budget, limit


def _choose_block_b(b, n, d, n_s, hid, vmem_budget_bytes, in_itemsize=2,
                    prefer_even_grid=True):
    """Largest divisor of b that fits the budget; prefer an even grid (>=2)
    so ("parallel",) semantics can shard across v7x's two TensorCores."""
    per_batch = (
        2 * n * d * in_itemsize            # x block, double-buffered
        + 4 * (5 * n * d)                  # xin + fused kv + k3/v3 (f32)
        + 4 * n_s * (12 * d + hid)         # slot-loop temporaries (f32)
        + 2 * 4 * n_s * d                  # output block, double-buffered
    )
    cap = max(1, vmem_budget_bytes // max(per_batch, 1))
    divisors = [x for x in range(1, b + 1) if b % x == 0 and x <= cap]
    if not divisors:
        divisors = [1]
    if prefer_even_grid:
        even = [x for x in divisors if (b // x) % 2 == 0]
        if even:
            return max(even)
    return max(divisors)


def slot_attention(inputs, slots_emb, params, *, iters=3, eps=1e-8,
                   block_b=None, mxu_dtype=jnp.bfloat16,
                   input_dtype=jnp.bfloat16):
    b, n, d = inputs.shape
    n_s = slots_emb.shape[0]
    hid = params["mlp_w1"].shape[1]
    scale = float(d) ** -0.5
    f32 = jnp.float32

    vmem_budget, vmem_limit = _vmem_config()
    in_itemsize = jnp.dtype(input_dtype).itemsize
    if block_b is None:
        block_b = _choose_block_b(b, n, d, n_s, hid, vmem_budget,
                                  in_itemsize=in_itemsize)
    if b % block_b:
        raise ValueError("block_b must divide the batch size")
    grid = b // block_b

    # HBM-side input cast: kernel is read-bound on x; bf16 halves the bytes.
    x_in = inputs.astype(input_dtype)

    # --- parameter packing -----------------------------------------------
    wkv = jnp.concatenate([params["wk"], params["wv"]], axis=1).astype(f32)
    bkv = jnp.concatenate([params["bk"], params["bv"]], axis=1).astype(f32)
    ln_pack = jnp.concatenate(
        [params["ln_in_g"], params["ln_in_b"],
         params["ln_s_g"], params["ln_s_b"],
         params["ln_ff_g"], params["ln_ff_b"]], axis=0).astype(f32)  # (6, D)
    wq_s = (params["wq"] * scale).astype(f32)          # scale folded into Q proj
    bq_s = (params["bq"] * scale).astype(f32)
    gru_wcat = jnp.concatenate([params["gru_wih"], params["gru_whh"]],
                               axis=0).astype(f32)      # (2D, 3D)
    gru_bsum = (params["gru_bih"] + params["gru_bhh"]).astype(f32)
    gru_whn = params["gru_whh"][:, 2 * d:3 * d].astype(f32)
    gru_bhn = params["gru_bhh"][:, 2 * d:3 * d].astype(f32)

    param_list = [
        ln_pack, wkv, bkv, wq_s, bq_s,
        gru_wcat, gru_bsum, gru_whn, gru_bhn,
        params["mlp_w1"].astype(f32), params["mlp_b1"].astype(f32),
        params["mlp_w2"].astype(f32), params["mlp_b2"].astype(f32),
    ]

    def shared(shape):
        nd = len(shape)
        # TODO(synk): pipeline_mode=pl.Buffered(1) would drop the second VMEM
        # buffer for these constant-index params; left default for portability.
        return pl.BlockSpec(shape, lambda bi, _nd=nd: (0,) * _nd)

    in_specs = [
        pl.BlockSpec((block_b, n, d), lambda bi: (bi, 0, 0)),   # batched input
        shared((n_s, d)),                                       # slot embedding
    ] + [shared(p.shape) for p in param_list]

    kernel = functools.partial(
        _slot_attention_kernel,
        iters=iters, eps=eps, d=d, n=n, n_s=n_s, block_b=block_b,
        mxu_dtype=mxu_dtype)

    return pl.pallas_call(
        kernel,
        out_shape=jax.ShapeDtypeStruct((b, n_s, d), jnp.float32),
        grid_spec=pltpu.PrefetchScalarGridSpec(
            num_scalar_prefetch=0,
            grid=(grid,),
            in_specs=in_specs,
            out_specs=pl.BlockSpec((block_b, n_s, d), lambda bi: (bi, 0, 0)),
        ),
        compiler_params=pltpu.CompilerParams(
            dimension_semantics=("parallel",),
            vmem_limit_bytes=int(vmem_limit),
        ),
    )(x_in, slots_emb.astype(f32), *param_list)


# --------------------------- pure-JAX reference ---------------------------
def slot_attention_ref(inputs, slots_emb, p, *, iters=3, eps=1e-8):
    b, n, d = inputs.shape
    scale = float(d) ** -0.5
    ln = lambda x, g, bb: _layer_norm(x, g, bb)
    xin = ln(inputs, p["ln_in_g"], p["ln_in_b"])
    k = xin @ p["wk"] + p["bk"]
    v = xin @ p["wv"] + p["bv"]
    slots = jnp.broadcast_to(slots_emb[None], (b,) + slots_emb.shape)
    for _ in range(iters):
        slots_prev = slots
        s_n = ln(slots, p["ln_s_g"], p["ln_s_b"])
        q = s_n @ p["wq"] + p["bq"]
        dots = jnp.einsum("bid,bjd->bij", q, k) * scale
        attn = jax.nn.softmax(dots, axis=1) + eps
        attn = attn / jnp.sum(attn, axis=-1, keepdims=True)
        updates = jnp.einsum("bjd,bij->bid", v, attn)
        gi = updates @ p["gru_wih"] + p["gru_bih"]
        gh = slots_prev @ p["gru_whh"] + p["gru_bhh"]
        r = jax.nn.sigmoid(gi[..., :d] + gh[..., :d])
        z = jax.nn.sigmoid(gi[..., d:2 * d] + gh[..., d:2 * d])
        n_g = jnp.tanh(gi[..., 2 * d:] + r * gh[..., 2 * d:])
        slots = (1.0 - z) * n_g + z * slots_prev
        s_ff = ln(slots, p["ln_ff_g"], p["ln_ff_b"])
        h = jnp.maximum(s_ff @ p["mlp_w1"] + p["mlp_b1"], 0.0)
        slots = slots + (h @ p["mlp_w2"] + p["mlp_b2"])
    return slots


if __name__ == "__main__":
    # Small, forward-consistent shapes: B=2, N=16 tokens, D=32 features,
    # S=8 slots, MLP hidden = max(D, 128) = 128, iters=3.
    B, N, D, S = 2, 16, 32, 8
    HID = max(D, 128)
    ITERS, EPS = 3, 1e-8

    key = jax.random.PRNGKey(0)
    ks = jax.random.split(key, 16)

    def w(k_, shape, scale_=0.1):
        return jax.random.normal(k_, shape, jnp.float32) * scale_

    params = {
        "ln_in_g": jnp.ones((1, D), jnp.float32),
        "ln_in_b": jnp.zeros((1, D), jnp.float32),
        "ln_s_g": jnp.ones((1, D), jnp.float32),
        "ln_s_b": jnp.zeros((1, D), jnp.float32),
        "ln_ff_g": jnp.ones((1, D), jnp.float32),
        "ln_ff_b": jnp.zeros((1, D), jnp.float32),
        "wq": w(ks[0], (D, D)), "bq": w(ks[1], (1, D)),
        "wk": w(ks[2], (D, D)), "bk": w(ks[3], (1, D)),
        "wv": w(ks[4], (D, D)), "bv": w(ks[5], (1, D)),
        # GRUCell: torch weight_ih/hh are (3D, D); stored transposed as (D, 3D)
        "gru_wih": w(ks[6], (D, 3 * D)), "gru_bih": w(ks[7], (1, 3 * D)),
        "gru_whh": w(ks[8], (D, 3 * D)), "gru_bhh": w(ks[9], (1, 3 * D)),
        "mlp_w1": w(ks[10], (D, HID)), "mlp_b1": w(ks[11], (1, HID)),
        "mlp_w2": w(ks[12], (HID, D)), "mlp_b2": w(ks[13], (1, D)),
    }
    slots_emb = w(ks[14], (S, D), 1.0)       # nn.Embedding(num_slots, D) table
    inputs = jax.random.normal(ks[15], (B, N, D), jnp.float32)

    ref = slot_attention_ref(inputs, slots_emb, params, iters=ITERS, eps=EPS)

    # Default (performance) path: bf16 HBM input + bf16 MXU operands.
    out = slot_attention(inputs, slots_emb, params, iters=ITERS, eps=EPS)
    out = jax.block_until_ready(out)
    assert out.shape == (B, S, D)
    assert jnp.allclose(out, ref, rtol=5e-2, atol=5e-2), \
        "bf16 kernel mismatch vs reference"

    # Full-precision path: validates exact math (fused KV/GRU, folded scale,
    # explicit softmax) against the reference with a tight tolerance.
    out_f32 = slot_attention(inputs, slots_emb, params, iters=ITERS, eps=EPS,
                             mxu_dtype=jnp.float32, input_dtype=jnp.float32)
    out_f32 = jax.block_until_ready(out_f32)
    assert jnp.allclose(out_f32, ref, rtol=1e-3, atol=1e-3), \
        "f32 kernel mismatch vs reference"

    print("KERNEL_OK")
</pallas_src>

<mosaic_0001>
module attributes {stable_mosaic.version = 11 : i64} {
  func.func @_slot_attention_kernel(%arg0: i32, %arg1: memref<1x16x32xbf16, #tpu.memory_space<vmem>>, %arg2: memref<8x32xf32, #tpu.memory_space<vmem>>, %arg3: memref<6x32xf32, #tpu.memory_space<vmem>>, %arg4: memref<32x64xf32, #tpu.memory_space<vmem>>, %arg5: memref<1x64xf32, #tpu.memory_space<vmem>>, %arg6: memref<32x32xf32, #tpu.memory_space<vmem>>, %arg7: memref<1x32xf32, #tpu.memory_space<vmem>>, %arg8: memref<64x96xf32, #tpu.memory_space<vmem>>, %arg9: memref<1x96xf32, #tpu.memory_space<vmem>>, %arg10: memref<32x32xf32, #tpu.memory_space<vmem>>, %arg11: memref<1x32xf32, #tpu.memory_space<vmem>>, %arg12: memref<32x128xf32, #tpu.memory_space<vmem>>, %arg13: memref<1x128xf32, #tpu.memory_space<vmem>>, %arg14: memref<128x32xf32, #tpu.memory_space<vmem>>, %arg15: memref<1x32xf32, #tpu.memory_space<vmem>>, %arg16: memref<1x8x32xf32, #tpu.memory_space<vmem>>) attributes {dimension_semantics = [#tpu.dimension_semantics<parallel>], iteration_bounds = array<i64: 2>, scalar_prefetch = 0 : i64, scratch_operands = 0 : i64, tpu.core_type = #tpu.core_type<tc>, window_params = [{transform_indices = @transform_0, window_bounds = array<i64: 1, 16, 32>}, {pipeline_mode = #tpu.pipeline_mode<synchronous>, transform_indices = @transform_1, window_bounds = array<i64: 8, 32>}, {pipeline_mode = #tpu.pipeline_mode<synchronous>, transform_indices = @transform_2, window_bounds = array<i64: 6, 32>}, {pipeline_mode = #tpu.pipeline_mode<synchronous>, transform_indices = @transform_3, window_bounds = array<i64: 32, 64>}, {pipeline_mode = #tpu.pipeline_mode<synchronous>, transform_indices = @transform_4, window_bounds = array<i64: 1, 64>}, {pipeline_mode = #tpu.pipeline_mode<synchronous>, transform_indices = @transform_5, window_bounds = array<i64: 32, 32>}, {pipeline_mode = #tpu.pipeline_mode<synchronous>, transform_indices = @transform_6, window_bounds = array<i64: 1, 32>}, {pipeline_mode = #tpu.pipeline_mode<synchronous>, transform_indices = @transform_7, window_bounds = array<i64: 64, 96>}, {pipeline_mode = #tpu.pipeline_mode<synchronous>, transform_indices = @transform_8, window_bounds = array<i64: 1, 96>}, {pipeline_mode = #tpu.pipeline_mode<synchronous>, transform_indices = @transform_9, window_bounds = array<i64: 32, 32>}, {pipeline_mode = #tpu.pipeline_mode<synchronous>, transform_indices = @transform_10, window_bounds = array<i64: 1, 32>}, {pipeline_mode = #tpu.pipeline_mode<synchronous>, transform_indices = @transform_11, window_bounds = array<i64: 32, 128>}, {pipeline_mode = #tpu.pipeline_mode<synchronous>, transform_indices = @transform_12, window_bounds = array<i64: 1, 128>}, {pipeline_mode = #tpu.pipeline_mode<synchronous>, transform_indices = @transform_13, window_bounds = array<i64: 128, 32>}, {pipeline_mode = #tpu.pipeline_mode<synchronous>, transform_indices = @transform_14, window_bounds = array<i64: 1, 32>}, {transform_indices = @transform_15, window_bounds = array<i64: 1, 8, 32>}]} {
    %c0 = arith.constant 0 : index
    %c0_0 = arith.constant 0 : index
    %0 = vector.load %arg3[%c0, %c0_0] : memref<6x32xf32, #tpu.memory_space<vmem>>, vector<1x32xf32>
    %c1 = arith.constant 1 : index
    %c0_1 = arith.constant 0 : index
    %1 = vector.load %arg3[%c1, %c0_1] : memref<6x32xf32, #tpu.memory_space<vmem>>, vector<1x32xf32>
    %c2 = arith.constant 2 : index
    %c0_2 = arith.constant 0 : index
    %2 = vector.load %arg3[%c2, %c0_2] : memref<6x32xf32, #tpu.memory_space<vmem>>, vector<1x32xf32>
    %c3 = arith.constant 3 : index
    %c0_3 = arith.constant 0 : index
    %3 = vector.load %arg3[%c3, %c0_3] : memref<6x32xf32, #tpu.memory_space<vmem>>, vector<1x32xf32>
    %c4 = arith.constant 4 : index
    %c0_4 = arith.constant 0 : index
    %4 = vector.load %arg3[%c4, %c0_4] : memref<6x32xf32, #tpu.memory_space<vmem>>, vector<1x32xf32>
    %c5 = arith.constant 5 : index
    %c0_5 = arith.constant 0 : index
    %5 = vector.load %arg3[%c5, %c0_5] : memref<6x32xf32, #tpu.memory_space<vmem>>, vector<1x32xf32>
    %c0_6 = arith.constant 0 : index
    %c0_7 = arith.constant 0 : index
    %6 = vector.load %arg6[%c0_6, %c0_7] : memref<32x32xf32, #tpu.memory_space<vmem>>, vector<32x32xf32>
    %7 = arith.truncf %6 : vector<32x32xf32> to vector<32x32xbf16>
    %c0_8 = arith.constant 0 : index
    %c0_9 = arith.constant 0 : index
    %8 = vector.load %arg8[%c0_8, %c0_9] : memref<64x96xf32, #tpu.memory_space<vmem>>, vector<64x96xf32>
    %9 = arith.truncf %8 : vector<64x96xf32> to vector<64x96xbf16>
    %c0_10 = arith.constant 0 : index
    %c0_11 = arith.constant 0 : index
    %10 = vector.load %arg10[%c0_10, %c0_11] : memref<32x32xf32, #tpu.memory_space<vmem>>, vector<32x32xf32>
    %11 = arith.truncf %10 : vector<32x32xf32> to vector<32x32xbf16>
    %c0_12 = arith.constant 0 : index
    %c0_13 = arith.constant 0 : index
    %12 = vector.load %arg12[%c0_12, %c0_13] : memref<32x128xf32, #tpu.memory_space<vmem>>, vector<32x128xf32>
    %13 = arith.truncf %12 : vector<32x128xf32> to vector<32x128xbf16>
    %c0_14 = arith.constant 0 : index
    %c0_15 = arith.constant 0 : index
    %14 = vector.load %arg14[%c0_14, %c0_15] : memref<128x32xf32, #tpu.memory_space<vmem>>, vector<128x32xf32>
    %15 = arith.truncf %14 : vector<128x32xf32> to vector<128x32xbf16>
    %c0_16 = arith.constant 0 : index
    %c0_17 = arith.constant 0 : index
    %16 = vector.load %arg7[%c0_16, %c0_17] : memref<1x32xf32, #tpu.memory_space<vmem>>, vector<1x32xf32>
    %c0_18 = arith.constant 0 : index
    %c0_19 = arith.constant 0 : index
    %17 = vector.load %arg9[%c0_18, %c0_19] : memref<1x96xf32, #tpu.memory_space<vmem>>, vector<1x96xf32>
    %c0_20 = arith.constant 0 : index
    %c0_21 = arith.constant 0 : index
    %18 = vector.load %arg11[%c0_20, %c0_21] : memref<1x32xf32, #tpu.memory_space<vmem>>, vector<1x32xf32>
    %c0_22 = arith.constant 0 : index
    %c0_23 = arith.constant 0 : index
    %19 = vector.load %arg13[%c0_22, %c0_23] : memref<1x128xf32, #tpu.memory_space<vmem>>, vector<1x128xf32>
    %c0_24 = arith.constant 0 : index
    %c0_25 = arith.constant 0 : index
    %20 = vector.load %arg15[%c0_24, %c0_25] : memref<1x32xf32, #tpu.memory_space<vmem>>, vector<1x32xf32>
    %c0_26 = arith.constant 0 : index
    %c0_27 = arith.constant 0 : index
    %c0_28 = arith.constant 0 : index
    %21 = vector.load %arg1[%c0_26, %c0_27, %c0_28] : memref<1x16x32xbf16, #tpu.memory_space<vmem>>, vector<1x16x32xbf16>
    %22 = arith.extf %21 : vector<1x16x32xbf16> to vector<1x16x32xf32>
    %23 = vector.shape_cast %22 : vector<1x16x32xf32> to vector<16x32xf32>
    %cst = arith.constant dense<0.000000e+00> : vector<16xf32>
    %24 = vector.multi_reduction <add>, %23, %cst [1] : vector<16x32xf32> to vector<16xf32>
    %25 = vector.shape_cast %24 : vector<16xf32> to vector<16x1xf32>
    %cst_29 = arith.constant 3.200000e+01 : f32
    %26 = vector.broadcast %cst_29 : f32 to vector<16x1xf32>
    %27 = arith.divf %25, %26 : vector<16x1xf32>
    %28 = vector.broadcast %27 : vector<16x1xf32> to vector<16x32xf32>
    %29 = arith.subf %23, %28 : vector<16x32xf32>
    %30 = arith.mulf %29, %29 : vector<16x32xf32>
    %cst_30 = arith.constant dense<0.000000e+00> : vector<16xf32>
    %31 = vector.multi_reduction <add>, %30, %cst_30 [1] : vector<16x32xf32> to vector<16xf32>
    %32 = vector.shape_cast %31 : vector<16xf32> to vector<16x1xf32>
    %cst_31 = arith.constant 3.200000e+01 : f32
    %33 = vector.broadcast %cst_31 : f32 to vector<16x1xf32>
    %34 = arith.divf %32, %33 : vector<16x1xf32>
    %35 = vector.broadcast %27 : vector<16x1xf32> to vector<16x32xf32>
    %36 = arith.subf %23, %35 : vector<16x32xf32>
    %cst_32 = arith.constant 9.99999974E-6 : f32
    %37 = vector.broadcast %cst_32 : f32 to vector<16x1xf32>
    %38 = arith.addf %34, %37 : vector<16x1xf32>
    %39 = math.rsqrt %38 : vector<16x1xf32>
    %40 = vector.broadcast %39 : vector<16x1xf32> to vector<16x32xf32>
    %41 = arith.mulf %36, %40 : vector<16x32xf32>
    %42 = vector.broadcast %0 : vector<1x32xf32> to vector<16x32xf32>
    %43 = arith.mulf %41, %42 : vector<16x32xf32>
    %44 = vector.broadcast %1 : vector<1x32xf32> to vector<16x32xf32>
    %45 = arith.addf %43, %44 : vector<16x32xf32>
    %46 = arith.truncf %45 : vector<16x32xf32> to vector<16x32xbf16>
    %c0_33 = arith.constant 0 : index
    %c0_34 = arith.constant 0 : index
    %47 = vector.load %arg4[%c0_33, %c0_34] : memref<32x64xf32, #tpu.memory_space<vmem>>, vector<32x64xf32>
    %48 = arith.truncf %47 : vector<32x64xf32> to vector<32x64xbf16>
    %cst_35 = arith.constant dense<0.000000e+00> : vector<16x64xf32>
    %49 = tpu.matmul %46, %48, %cst_35 {dimension_numbers = #tpu.dot_dimension_numbers<[1], [0], [0], [1], [0, 0, 1, 1], [], []>} : vector<16x32xbf16>, vector<32x64xbf16>, vector<16x64xf32> -> vector<16x64xf32>
    %c0_36 = arith.constant 0 : index
    %c0_37 = arith.constant 0 : index
    %50 = vector.load %arg5[%c0_36, %c0_37] : memref<1x64xf32, #tpu.memory_space<vmem>>, vector<1x64xf32>
    %51 = vector.broadcast %50 : vector<1x64xf32> to vector<16x64xf32>
    %52 = arith.addf %49, %51 : vector<16x64xf32>
    %53 = vector.extract_strided_slice %52 {offsets = [0, 0], sizes = [16, 32], strides = [1, 1]} : vector<16x64xf32> to vector<16x32xf32>
    %54 = vector.shape_cast %53 : vector<16x32xf32> to vector<1x16x32xf32>
    %55 = arith.truncf %54 : vector<1x16x32xf32> to vector<1x16x32xbf16>
    %56 = vector.extract_strided_slice %52 {offsets = [0, 32], sizes = [16, 32], strides = [1, 1]} : vector<16x64xf32> to vector<16x32xf32>
    %57 = vector.shape_cast %56 : vector<16x32xf32> to vector<1x16x32xf32>
    %58 = arith.truncf %57 : vector<1x16x32xf32> to vector<1x16x32xbf16>
    %c0_38 = arith.constant 0 : index
    %c0_39 = arith.constant 0 : index
    %59 = vector.load %arg2[%c0_38, %c0_39] : memref<8x32xf32, #tpu.memory_space<vmem>>, vector<8x32xf32>
    %cst_40 = arith.constant dense<0.000000e+00> : vector<8xf32>
    %60 = vector.multi_reduction <add>, %59, %cst_40 [1] : vector<8x32xf32> to vector<8xf32>
    %61 = vector.shape_cast %60 : vector<8xf32> to vector<8x1xf32>
    %cst_41 = arith.constant 3.200000e+01 : f32
    %62 = vector.broadcast %cst_41 : f32 to vector<8x1xf32>
    %63 = arith.divf %61, %62 : vector<8x1xf32>
    %64 = vector.broadcast %63 : vector<8x1xf32> to vector<8x32xf32>
    %65 = arith.subf %59, %64 : vector<8x32xf32>
    %66 = arith.mulf %65, %65 : vector<8x32xf32>
    %cst_42 = arith.constant dense<0.000000e+00> : vector<8xf32>
    %67 = vector.multi_reduction <add>, %66, %cst_42 [1] : vector<8x32xf32> to vector<8xf32>
    %68 = vector.shape_cast %67 : vector<8xf32> to vector<8x1xf32>
    %cst_43 = arith.constant 3.200000e+01 : f32
    %69 = vector.broadcast %cst_43 : f32 to vector<8x1xf32>
    %70 = arith.divf %68, %69 : vector<8x1xf32>
    %71 = vector.broadcast %63 : vector<8x1xf32> to vector<8x32xf32>
    %72 = arith.subf %59, %71 : vector<8x32xf32>
    %cst_44 = arith.constant 9.99999974E-6 : f32
    %73 = vector.broadcast %cst_44 : f32 to vector<8x1xf32>
    %74 = arith.addf %70, %73 : vector<8x1xf32>
    %75 = math.rsqrt %74 : vector<8x1xf32>
    %76 = vector.broadcast %75 : vector<8x1xf32> to vector<8x32xf32>
    %77 = arith.mulf %72, %76 : vector<8x32xf32>
    %78 = vector.broadcast %2 : vector<1x32xf32> to vector<8x32xf32>
    %79 = arith.mulf %77, %78 : vector<8x32xf32>
    %80 = vector.broadcast %3 : vector<1x32xf32> to vector<8x32xf32>
    %81 = arith.addf %79, %80 : vector<8x32xf32>
    %82 = arith.truncf %81 : vector<8x32xf32> to vector<8x32xbf16>
    %cst_45 = arith.constant dense<0.000000e+00> : vector<8x32xf32>
    %83 = tpu.matmul %82, %7, %cst_45 {dimension_numbers = #tpu.dot_dimension_numbers<[1], [0], [0], [1], [0, 0, 1, 1], [], []>} : vector<8x32xbf16>, vector<32x32xbf16>, vector<8x32xf32> -> vector<8x32xf32>
    %84 = vector.broadcast %16 : vector<1x32xf32> to vector<8x32xf32>
    %85 = arith.addf %83, %84 : vector<8x32xf32>
    %86 = vector.shape_cast %85 : vector<8x32xf32> to vector<1x8x32xf32>
    %87 = arith.truncf %86 : vector<1x8x32xf32> to vector<1x8x32xbf16>
    "tpu.trace_start"() <{level = 10 : i32, message = "bid,bjd->bij"}> : () -> ()
    %cst_46 = arith.constant dense<0.000000e+00> : vector<1x8x16xf32>
    %88 = tpu.matmul %87, %55, %cst_46 {dimension_numbers = #tpu.dot_dimension_numbers<[2], [2], [1], [1], [0, 0, 0, 1, 1, 1], [0], [0]>} : vector<1x8x32xbf16>, vector<1x16x32xbf16>, vector<1x8x16xf32> -> vector<1x8x16xf32>
    "tpu.trace_stop"() : () -> ()
    %cst_47 = arith.constant dense<0xFF800000> : vector<1x16xf32>
    %89 = vector.multi_reduction <maximumf>, %88, %cst_47 [1] : vector<1x8x16xf32> to vector<1x16xf32>
    %90 = vector.shape_cast %89 : vector<1x16xf32> to vector<1x1x16xf32>
    %91 = vector.broadcast %90 : vector<1x1x16xf32> to vector<1x8x16xf32>
    %92 = arith.subf %88, %91 : vector<1x8x16xf32>
    %93 = math.exp %92 : vector<1x8x16xf32>
    %cst_48 = arith.constant dense<0.000000e+00> : vector<1x16xf32>
    %94 = vector.multi_reduction <add>, %93, %cst_48 [1] : vector<1x8x16xf32> to vector<1x16xf32>
    %95 = vector.shape_cast %94 : vector<1x16xf32> to vector<1x1x16xf32>
    %96 = tpu.reciprocal %95 : vector<1x1x16xf32> -> vector<1x1x16xf32>
    %97 = vector.broadcast %96 : vector<1x1x16xf32> to vector<1x8x16xf32>
    %98 = arith.mulf %93, %97 : vector<1x8x16xf32>
    %cst_49 = arith.constant 9.99999993E-9 : f32
    %99 = vector.broadcast %cst_49 : f32 to vector<1x8x16xf32>
    %100 = arith.addf %98, %99 : vector<1x8x16xf32>
    %cst_50 = arith.constant dense<0.000000e+00> : vector<1x8xf32>
    %101 = vector.multi_reduction <add>, %100, %cst_50 [2] : vector<1x8x16xf32> to vector<1x8xf32>
    %102 = vector.shape_cast %101 : vector<1x8xf32> to vector<1x8x1xf32>
    %103 = tpu.reciprocal %102 : vector<1x8x1xf32> -> vector<1x8x1xf32>
    %104 = vector.broadcast %103 : vector<1x8x1xf32> to vector<1x8x16xf32>
    %105 = arith.mulf %100, %104 : vector<1x8x16xf32>
    %106 = arith.truncf %105 : vector<1x8x16xf32> to vector<1x8x16xbf16>
    "tpu.trace_start"() <{level = 10 : i32, message = "bij,bjd->bid"}> : () -> ()
    %cst_51 = arith.constant dense<0.000000e+00> : vector<1x8x32xf32>
    %107 = tpu.matmul %106, %58, %cst_51 {dimension_numbers = #tpu.dot_dimension_numbers<[2], [1], [1], [2], [0, 0, 0, 1, 1, 2], [0], [0]>} : vector<1x8x16xbf16>, vector<1x16x32xbf16>, vector<1x8x32xf32> -> vector<1x8x32xf32>
    "tpu.trace_stop"() : () -> ()
    %108 = vector.shape_cast %107 : vector<1x8x32xf32> to vector<8x32xf32>
    %109 = tpu.concatenate %108, %59 in 1 : vector<8x32xf32>, vector<8x32xf32> -> vector<8x64xf32>
    %110 = arith.truncf %109 : vector<8x64xf32> to vector<8x64xbf16>
    %cst_52 = arith.constant dense<0.000000e+00> : vector<8x96xf32>
    %111 = tpu.matmul %110, %9, %cst_52 {dimension_numbers = #tpu.dot_dimension_numbers<[1], [0], [0], [1], [0, 0, 1, 1], [], []>} : vector<8x64xbf16>, vector<64x96xbf16>, vector<8x96xf32> -> vector<8x96xf32>
    %112 = vector.broadcast %17 : vector<1x96xf32> to vector<8x96xf32>
    %113 = arith.addf %111, %112 : vector<8x96xf32>
    %114 = arith.truncf %59 : vector<8x32xf32> to vector<8x32xbf16>
    %cst_53 = arith.constant dense<0.000000e+00> : vector<8x32xf32>
    %115 = tpu.matmul %114, %11, %cst_53 {dimension_numbers = #tpu.dot_dimension_numbers<[1], [0], [0], [1], [0, 0, 1, 1], [], []>} : vector<8x32xbf16>, vector<32x32xbf16>, vector<8x32xf32> -> vector<8x32xf32>
    %116 = vector.broadcast %18 : vector<1x32xf32> to vector<8x32xf32>
    %117 = arith.addf %115, %116 : vector<8x32xf32>
    %118 = vector.extract_strided_slice %113 {offsets = [0, 0], sizes = [8, 32], strides = [1, 1]} : vector<8x96xf32> to vector<8x32xf32>
    %119 = arith.negf %118 : vector<8x32xf32>
    %120 = math.exp %119 : vector<8x32xf32>
    %cst_54 = arith.constant 1.000000e+00 : f32
    %121 = vector.broadcast %cst_54 : f32 to vector<8x32xf32>
    %122 = arith.addf %121, %120 : vector<8x32xf32>
    %123 = arith.divf %121, %122 : vector<8x32xf32>
    %124 = vector.extract_strided_slice %113 {offsets = [0, 32], sizes = [8, 32], strides = [1, 1]} : vector<8x96xf32> to vector<8x32xf32>
    %125 = arith.negf %124 : vector<8x32xf32>
    %126 = math.exp %125 : vector<8x32xf32>
    %cst_55 = arith.constant 1.000000e+00 : f32
    %127 = vector.broadcast %cst_55 : f32 to vector<8x32xf32>
    %128 = arith.addf %127, %126 : vector<8x32xf32>
    %129 = arith.divf %127, %128 : vector<8x32xf32>
    %130 = vector.extract_strided_slice %113 {offsets = [0, 64], sizes = [8, 32], strides = [1, 1]} : vector<8x96xf32> to vector<8x32xf32>
    %cst_56 = arith.constant 1.000000e+00 : f32
    %131 = vector.broadcast %cst_56 : f32 to vector<8x32xf32>
    %132 = arith.subf %123, %131 : vector<8x32xf32>
    %133 = arith.mulf %132, %117 : vector<8x32xf32>
    %134 = arith.addf %130, %133 : vector<8x32xf32>
    %135 = math.tanh %134 : vector<8x32xf32>
    %cst_57 = arith.constant 1.000000e+00 : f32
    %136 = vector.broadcast %cst_57 : f32 to vector<8x32xf32>
    %137 = arith.subf %136, %129 : vector<8x32xf32>
    %138 = arith.mulf %137, %135 : vector<8x32xf32>
    %139 = arith.mulf %129, %59 : vector<8x32xf32>
    %140 = arith.addf %138, %139 : vector<8x32xf32>
    %cst_58 = arith.constant dense<0.000000e+00> : vector<8xf32>
    %141 = vector.multi_reduction <add>, %140, %cst_58 [1] : vector<8x32xf32> to vector<8xf32>
    %142 = vector.shape_cast %141 : vector<8xf32> to vector<8x1xf32>
    %cst_59 = arith.constant 3.200000e+01 : f32
    %143 = vector.broadcast %cst_59 : f32 to vector<8x1xf32>
    %144 = arith.divf %142, %143 : vector<8x1xf32>
    %145 = vector.broadcast %144 : vector<8x1xf32> to vector<8x32xf32>
    %146 = arith.subf %140, %145 : vector<8x32xf32>
    %147 = arith.mulf %146, %146 : vector<8x32xf32>
    %cst_60 = arith.constant dense<0.000000e+00> : vector<8xf32>
    %148 = vector.multi_reduction <add>, %147, %cst_60 [1] : vector<8x32xf32> to vector<8xf32>
    %149 = vector.shape_cast %148 : vector<8xf32> to vector<8x1xf32>
    %cst_61 = arith.constant 3.200000e+01 : f32
    %150 = vector.broadcast %cst_61 : f32 to vector<8x1xf32>
    %151 = arith.divf %149, %150 : vector<8x1xf32>
    %152 = vector.broadcast %144 : vector<8x1xf32> to vector<8x32xf32>
    %153 = arith.subf %140, %152 : vector<8x32xf32>
    %cst_62 = arith.constant 9.99999974E-6 : f32
    %154 = vector.broadcast %cst_62 : f32 to vector<8x1xf32>
    %155 = arith.addf %151, %154 : vector<8x1xf32>
    %156 = math.rsqrt %155 : vector<8x1xf32>
    %157 = vector.broadcast %156 : vector<8x1xf32> to vector<8x32xf32>
    %158 = arith.mulf %153, %157 : vector<8x32xf32>
    %159 = vector.broadcast %4 : vector<1x32xf32> to vector<8x32xf32>
    %160 = arith.mulf %158, %159 : vector<8x32xf32>
    %161 = vector.broadcast %5 : vector<1x32xf32> to vector<8x32xf32>
    %162 = arith.addf %160, %161 : vector<8x32xf32>
    %163 = arith.truncf %162 : vector<8x32xf32> to vector<8x32xbf16>
    %cst_63 = arith.constant dense<0.000000e+00> : vector<8x128xf32>
    %164 = tpu.matmul %163, %13, %cst_63 {dimension_numbers = #tpu.dot_dimension_numbers<[1], [0], [0], [1], [0, 0, 1, 1], [], []>} : vector<8x32xbf16>, vector<32x128xbf16>, vector<8x128xf32> -> vector<8x128xf32>
    %165 = vector.broadcast %19 : vector<1x128xf32> to vector<8x128xf32>
    %166 = arith.addf %164, %165 : vector<8x128xf32>
    %cst_64 = arith.constant 0.000000e+00 : f32
    %167 = vector.broadcast %cst_64 : f32 to vector<8x128xf32>
    %168 = arith.maximumf %166, %167 : vector<8x128xf32>
    %169 = arith.truncf %168 : vector<8x128xf32> to vector<8x128xbf16>
    %cst_65 = arith.constant dense<0.000000e+00> : vector<8x32xf32>
    %170 = tpu.matmul %169, %15, %cst_65 {dimension_numbers = #tpu.dot_dimension_numbers<[1], [0], [0], [1], [0, 0, 1, 1], [], []>} : vector<8x128xbf16>, vector<128x32xbf16>, vector<8x32xf32> -> vector<8x32xf32>
    %171 = arith.addf %140, %170 : vector<8x32xf32>
    %172 = vector.broadcast %20 : vector<1x32xf32> to vector<8x32xf32>
    %173 = arith.addf %171, %172 : vector<8x32xf32>
    %cst_66 = arith.constant dense<0.000000e+00> : vector<8xf32>
    %174 = vector.multi_reduction <add>, %173, %cst_66 [1] : vector<8x32xf32> to vector<8xf32>
    %175 = vector.shape_cast %174 : vector<8xf32> to vector<8x1xf32>
    %cst_67 = arith.constant 3.200000e+01 : f32
    %176 = vector.broadcast %cst_67 : f32 to vector<8x1xf32>
    %177 = arith.divf %175, %176 : vector<8x1xf32>
    %178 = vector.broadcast %177 : vector<8x1xf32> to vector<8x32xf32>
    %179 = arith.subf %173, %178 : vector<8x32xf32>
    %180 = arith.mulf %179, %179 : vector<8x32xf32>
    %cst_68 = arith.constant dense<0.000000e+00> : vector<8xf32>
    %181 = vector.multi_reduction <add>, %180, %cst_68 [1] : vector<8x32xf32> to vector<8xf32>
    %182 = vector.shape_cast %181 : vector<8xf32> to vector<8x1xf32>
    %cst_69 = arith.constant 3.200000e+01 : f32
    %183 = vector.broadcast %cst_69 : f32 to vector<8x1xf32>
    %184 = arith.divf %182, %183 : vector<8x1xf32>
    %185 = vector.broadcast %177 : vector<8x1xf32> to vector<8x32xf32>
    %186 = arith.subf %173, %185 : vector<8x32xf32>
    %cst_70 = arith.constant 9.99999974E-6 : f32
    %187 = vector.broadcast %cst_70 : f32 to vector<8x1xf32>
    %188 = arith.addf %184, %187 : vector<8x1xf32>
    %189 = math.rsqrt %188 : vector<8x1xf32>
    %190 = vector.broadcast %189 : vector<8x1xf32> to vector<8x32xf32>
    %191 = arith.mulf %186, %190 : vector<8x32xf32>
    %192 = vector.broadcast %2 : vector<1x32xf32> to vector<8x32xf32>
    %193 = arith.mulf %191, %192 : vector<8x32xf32>
    %194 = vector.broadcast %3 : vector<1x32xf32> to vector<8x32xf32>
    %195 = arith.addf %193, %194 : vector<8x32xf32>
    %196 = arith.truncf %195 : vector<8x32xf32> to vector<8x32xbf16>
    %cst_71 = arith.constant dense<0.000000e+00> : vector<8x32xf32>
    %197 = tpu.matmul %196, %7, %cst_71 {dimension_numbers = #tpu.dot_dimension_numbers<[1], [0], [0], [1], [0, 0, 1, 1], [], []>} : vector<8x32xbf16>, vector<32x32xbf16>, vector<8x32xf32> -> vector<8x32xf32>
    %198 = vector.broadcast %16 : vector<1x32xf32> to vector<8x32xf32>
    %199 = arith.addf %197, %198 : vector<8x32xf32>
    %200 = vector.shape_cast %199 : vector<8x32xf32> to vector<1x8x32xf32>
    %201 = arith.truncf %200 : vector<1x8x32xf32> to vector<1x8x32xbf16>
    "tpu.trace_start"() <{level = 10 : i32, message = "bid,bjd->bij"}> : () -> ()
    %cst_72 = arith.constant dense<0.000000e+00> : vector<1x8x16xf32>
    %202 = tpu.matmul %201, %55, %cst_72 {dimension_numbers = #tpu.dot_dimension_numbers<[2], [2], [1], [1], [0, 0, 0, 1, 1, 1], [0], [0]>} : vector<1x8x32xbf16>, vector<1x16x32xbf16>, vector<1x8x16xf32> -> vector<1x8x16xf32>
    "tpu.trace_stop"() : () -> ()
    %cst_73 = arith.constant dense<0xFF800000> : vector<1x16xf32>
    %203 = vector.multi_reduction <maximumf>, %202, %cst_73 [1] : vector<1x8x16xf32> to vector<1x16xf32>
    %204 = vector.shape_cast %203 : vector<1x16xf32> to vector<1x1x16xf32>
    %205 = vector.broadcast %204 : vector<1x1x16xf32> to vector<1x8x16xf32>
    %206 = arith.subf %202, %205 : vector<1x8x16xf32>
    %207 = math.exp %206 : vector<1x8x16xf32>
    %cst_74 = arith.constant dense<0.000000e+00> : vector<1x16xf32>
    %208 = vector.multi_reduction <add>, %207, %cst_74 [1] : vector<1x8x16xf32> to vector<1x16xf32>
    %209 = vector.shape_cast %208 : vector<1x16xf32> to vector<1x1x16xf32>
    %210 = tpu.reciprocal %209 : vector<1x1x16xf32> -> vector<1x1x16xf32>
    %211 = vector.broadcast %210 : vector<1x1x16xf32> to vector<1x8x16xf32>
    %212 = arith.mulf %207, %211 : vector<1x8x16xf32>
    %cst_75 = arith.constant 9.99999993E-9 : f32
    %213 = vector.broadcast %cst_75 : f32 to vector<1x8x16xf32>
    %214 = arith.addf %212, %213 : vector<1x8x16xf32>
    %cst_76 = arith.constant dense<0.000000e+00> : vector<1x8xf32>
    %215 = vector.multi_reduction <add>, %214, %cst_76 [2] : vector<1x8x16xf32> to vector<1x8xf32>
    %216 = vector.shape_cast %215 : vector<1x8xf32> to vector<1x8x1xf32>
    %217 = tpu.reciprocal %216 : vector<1x8x1xf32> -> vector<1x8x1xf32>
    %218 = vector.broadcast %217 : vector<1x8x1xf32> to vector<1x8x16xf32>
    %219 = arith.mulf %214, %218 : vector<1x8x16xf32>
    %220 = arith.truncf %219 : vector<1x8x16xf32> to vector<1x8x16xbf16>
    "tpu.trace_start"() <{level = 10 : i32, message = "bij,bjd->bid"}> : () -> ()
    %cst_77 = arith.constant dense<0.000000e+00> : vector<1x8x32xf32>
    %221 = tpu.matmul %220, %58, %cst_77 {dimension_numbers = #tpu.dot_dimension_numbers<[2], [1], [1], [2], [0, 0, 0, 1, 1, 2], [0], [0]>} : vector<1x8x16xbf16>, vector<1x16x32xbf16>, vector<1x8x32xf32> -> vector<1x8x32xf32>
    "tpu.trace_stop"() : () -> ()
    %222 = vector.shape_cast %221 : vector<1x8x32xf32> to vector<8x32xf32>
    %223 = tpu.concatenate %222, %173 in 1 : vector<8x32xf32>, vector<8x32xf32> -> vector<8x64xf32>
    %224 = arith.truncf %223 : vector<8x64xf32> to vector<8x64xbf16>
    %cst_78 = arith.constant dense<0.000000e+00> : vector<8x96xf32>
    %225 = tpu.matmul %224, %9, %cst_78 {dimension_numbers = #tpu.dot_dimension_numbers<[1], [0], [0], [1], [0, 0, 1, 1], [], []>} : vector<8x64xbf16>, vector<64x96xbf16>, vector<8x96xf32> -> vector<8x96xf32>
    %226 = vector.broadcast %17 : vector<1x96xf32> to vector<8x96xf32>
    %227 = arith.addf %225, %226 : vector<8x96xf32>
    %228 = arith.truncf %173 : vector<8x32xf32> to vector<8x32xbf16>
    %cst_79 = arith.constant dense<0.000000e+00> : vector<8x32xf32>
    %229 = tpu.matmul %228, %11, %cst_79 {dimension_numbers = #tpu.dot_dimension_numbers<[1], [0], [0], [1], [0, 0, 1, 1], [], []>} : vector<8x32xbf16>, vector<32x32xbf16>, vector<8x32xf32> -> vector<8x32xf32>
    %230 = vector.broadcast %18 : vector<1x32xf32> to vector<8x32xf32>
    %231 = arith.addf %229, %230 : vector<8x32xf32>
    %232 = vector.extract_strided_slice %227 {offsets = [0, 0], sizes = [8, 32], strides = [1, 1]} : vector<8x96xf32> to vector<8x32xf32>
    %233 = arith.negf %232 : vector<8x32xf32>
    %234 = math.exp %233 : vector<8x32xf32>
    %cst_80 = arith.constant 1.000000e+00 : f32
    %235 = vector.broadcast %cst_80 : f32 to vector<8x32xf32>
    %236 = arith.addf %235, %234 : vector<8x32xf32>
    %237 = arith.divf %235, %236 : vector<8x32xf32>
    %238 = vector.extract_strided_slice %227 {offsets = [0, 32], sizes = [8, 32], strides = [1, 1]} : vector<8x96xf32> to vector<8x32xf32>
    %239 = arith.negf %238 : vector<8x32xf32>
    %240 = math.exp %239 : vector<8x32xf32>
    %cst_81 = arith.constant 1.000000e+00 : f32
    %241 = vector.broadcast %cst_81 : f32 to vector<8x32xf32>
    %242 = arith.addf %241, %240 : vector<8x32xf32>
    %243 = arith.divf %241, %242 : vector<8x32xf32>
    %244 = vector.extract_strided_slice %227 {offsets = [0, 64], sizes = [8, 32], strides = [1, 1]} : vector<8x96xf32> to vector<8x32xf32>
    %cst_82 = arith.constant 1.000000e+00 : f32
    %245 = vector.broadcast %cst_82 : f32 to vector<8x32xf32>
    %246 = arith.subf %237, %245 : vector<8x32xf32>
    %247 = arith.mulf %246, %231 : vector<8x32xf32>
    %248 = arith.addf %244, %247 : vector<8x32xf32>
    %249 = math.tanh %248 : vector<8x32xf32>
    %cst_83 = arith.constant 1.000000e+00 : f32
    %250 = vector.broadcast %cst_83 : f32 to vector<8x32xf32>
    %251 = arith.subf %250, %243 : vector<8x32xf32>
    %252 = arith.mulf %251, %249 : vector<8x32xf32>
    %253 = arith.mulf %243, %173 : vector<8x32xf32>
    %254 = arith.addf %252, %253 : vector<8x32xf32>
    %cst_84 = arith.constant dense<0.000000e+00> : vector<8xf32>
    %255 = vector.multi_reduction <add>, %254, %cst_84 [1] : vector<8x32xf32> to vector<8xf32>
    %256 = vector.shape_cast %255 : vector<8xf32> to vector<8x1xf32>
    %cst_85 = arith.constant 3.200000e+01 : f32
    %257 = vector.broadcast %cst_85 : f32 to vector<8x1xf32>
    %258 = arith.divf %256, %257 : vector<8x1xf32>
    %259 = vector.broadcast %258 : vector<8x1xf32> to vector<8x32xf32>
    %260 = arith.subf %254, %259 : vector<8x32xf32>
    %261 = arith.mulf %260, %260 : vector<8x32xf32>
    %cst_86 = arith.constant dense<0.000000e+00> : vector<8xf32>
    %262 = vector.multi_reduction <add>, %261, %cst_86 [1] : vector<8x32xf32> to vector<8xf32>
    %263 = vector.shape_cast %262 : vector<8xf32> to vector<8x1xf32>
    %cst_87 = arith.constant 3.200000e+01 : f32
    %264 = vector.broadcast %cst_87 : f32 to vector<8x1xf32>
    %265 = arith.divf %263, %264 : vector<8x1xf32>
    %266 = vector.broadcast %258 : vector<8x1xf32> to vector<8x32xf32>
    %267 = arith.subf %254, %266 : vector<8x32xf32>
    %cst_88 = arith.constant 9.99999974E-6 : f32
    %268 = vector.broadcast %cst_88 : f32 to vector<8x1xf32>
    %269 = arith.addf %265, %268 : vector<8x1xf32>
    %270 = math.rsqrt %269 : vector<8x1xf32>
    %271 = vector.broadcast %270 : vector<8x1xf32> to vector<8x32xf32>
    %272 = arith.mulf %267, %271 : vector<8x32xf32>
    %273 = vector.broadcast %4 : vector<1x32xf32> to vector<8x32xf32>
    %274 = arith.mulf %272, %273 : vector<8x32xf32>
    %275 = vector.broadcast %5 : vector<1x32xf32> to vector<8x32xf32>
    %276 = arith.addf %274, %275 : vector<8x32xf32>
    %277 = arith.truncf %276 : vector<8x32xf32> to vector<8x32xbf16>
    %cst_89 = arith.constant dense<0.000000e+00> : vector<8x128xf32>
    %278 = tpu.matmul %277, %13, %cst_89 {dimension_numbers = #tpu.dot_dimension_numbers<[1], [0], [0], [1], [0, 0, 1, 1], [], []>} : vector<8x32xbf16>, vector<32x128xbf16>, vector<8x128xf32> -> vector<8x128xf32>
    %279 = vector.broadcast %19 : vector<1x128xf32> to vector<8x128xf32>
    %280 = arith.addf %278, %279 : vector<8x128xf32>
    %cst_90 = arith.constant 0.000000e+00 : f32
    %281 = vector.broadcast %cst_90 : f32 to vector<8x128xf32>
    %282 = arith.maximumf %280, %281 : vector<8x128xf32>
    %283 = arith.truncf %282 : vector<8x128xf32> to vector<8x128xbf16>
    %cst_91 = arith.constant dense<0.000000e+00> : vector<8x32xf32>
    %284 = tpu.matmul %283, %15, %cst_91 {dimension_numbers = #tpu.dot_dimension_numbers<[1], [0], [0], [1], [0, 0, 1, 1], [], []>} : vector<8x128xbf16>, vector<128x32xbf16>, vector<8x32xf32> -> vector<8x32xf32>
    %285 = arith.addf %254, %284 : vector<8x32xf32>
    %286 = vector.broadcast %20 : vector<1x32xf32> to vector<8x32xf32>
    %287 = arith.addf %285, %286 : vector<8x32xf32>
    %cst_92 = arith.constant dense<0.000000e+00> : vector<8xf32>
    %288 = vector.multi_reduction <add>, %287, %cst_92 [1] : vector<8x32xf32> to vector<8xf32>
    %289 = vector.shape_cast %288 : vector<8xf32> to vector<8x1xf32>
    %cst_93 = arith.constant 3.200000e+01 : f32
    %290 = vector.broadcast %cst_93 : f32 to vector<8x1xf32>
    %291 = arith.divf %289, %290 : vector<8x1xf32>
    %292 = vector.broadcast %291 : vector<8x1xf32> to vector<8x32xf32>
    %293 = arith.subf %287, %292 : vector<8x32xf32>
    %294 = arith.mulf %293, %293 : vector<8x32xf32>
    %cst_94 = arith.constant dense<0.000000e+00> : vector<8xf32>
    %295 = vector.multi_reduction <add>, %294, %cst_94 [1] : vector<8x32xf32> to vector<8xf32>
    %296 = vector.shape_cast %295 : vector<8xf32> to vector<8x1xf32>
    %cst_95 = arith.constant 3.200000e+01 : f32
    %297 = vector.broadcast %cst_95 : f32 to vector<8x1xf32>
    %298 = arith.divf %296, %297 : vector<8x1xf32>
    %299 = vector.broadcast %291 : vector<8x1xf32> to vector<8x32xf32>
    %300 = arith.subf %287, %299 : vector<8x32xf32>
    %cst_96 = arith.constant 9.99999974E-6 : f32
    %301 = vector.broadcast %cst_96 : f32 to vector<8x1xf32>
    %302 = arith.addf %298, %301 : vector<8x1xf32>
    %303 = math.rsqrt %302 : vector<8x1xf32>
    %304 = vector.broadcast %303 : vector<8x1xf32> to vector<8x32xf32>
    %305 = arith.mulf %300, %304 : vector<8x32xf32>
    %306 = vector.broadcast %2 : vector<1x32xf32> to vector<8x32xf32>
    %307 = arith.mulf %305, %306 : vector<8x32xf32>
    %308 = vector.broadcast %3 : vector<1x32xf32> to vector<8x32xf32>
    %309 = arith.addf %307, %308 : vector<8x32xf32>
    %310 = arith.truncf %309 : vector<8x32xf32> to vector<8x32xbf16>
    %cst_97 = arith.constant dense<0.000000e+00> : vector<8x32xf32>
    %311 = tpu.matmul %310, %7, %cst_97 {dimension_numbers = #tpu.dot_dimension_numbers<[1], [0], [0], [1], [0, 0, 1, 1], [], []>} : vector<8x32xbf16>, vector<32x32xbf16>, vector<8x32xf32> -> vector<8x32xf32>
    %312 = vector.broadcast %16 : vector<1x32xf32> to vector<8x32xf32>
    %313 = arith.addf %311, %312 : vector<8x32xf32>
    %314 = vector.shape_cast %313 : vector<8x32xf32> to vector<1x8x32xf32>
    %315 = arith.truncf %314 : vector<1x8x32xf32> to vector<1x8x32xbf16>
    "tpu.trace_start"() <{level = 10 : i32, message = "bid,bjd->bij"}> : () -> ()
    %cst_98 = arith.constant dense<0.000000e+00> : vector<1x8x16xf32>
    %316 = tpu.matmul %315, %55, %cst_98 {dimension_numbers = #tpu.dot_dimension_numbers<[2], [2], [1], [1], [0, 0, 0, 1, 1, 1], [0], [0]>} : vector<1x8x32xbf16>, vector<1x16x32xbf16>, vector<1x8x16xf32> -> vector<1x8x16xf32>
    "tpu.trace_stop"() : () -> ()
    %cst_99 = arith.constant dense<0xFF800000> : vector<1x16xf32>
    %317 = vector.multi_reduction <maximumf>, %316, %cst_99 [1] : vector<1x8x16xf32> to vector<1x16xf32>
    %318 = vector.shape_cast %317 : vector<1x16xf32> to vector<1x1x16xf32>
    %319 = vector.broadcast %318 : vector<1x1x16xf32> to vector<1x8x16xf32>
    %320 = arith.subf %316, %319 : vector<1x8x16xf32>
    %321 = math.exp %320 : vector<1x8x16xf32>
    %cst_100 = arith.constant dense<0.000000e+00> : vector<1x16xf32>
    %322 = vector.multi_reduction <add>, %321, %cst_100 [1] : vector<1x8x16xf32> to vector<1x16xf32>
    %323 = vector.shape_cast %322 : vector<1x16xf32> to vector<1x1x16xf32>
    %324 = tpu.reciprocal %323 : vector<1x1x16xf32> -> vector<1x1x16xf32>
    %325 = vector.broadcast %324 : vector<1x1x16xf32> to vector<1x8x16xf32>
    %326 = arith.mulf %321, %325 : vector<1x8x16xf32>
    %cst_101 = arith.constant 9.99999993E-9 : f32
    %327 = vector.broadcast %cst_101 : f32 to vector<1x8x16xf32>
    %328 = arith.addf %326, %327 : vector<1x8x16xf32>
    %cst_102 = arith.constant dense<0.000000e+00> : vector<1x8xf32>
    %329 = vector.multi_reduction <add>, %328, %cst_102 [2] : vector<1x8x16xf32> to vector<1x8xf32>
    %330 = vector.shape_cast %329 : vector<1x8xf32> to vector<1x8x1xf32>
    %331 = tpu.reciprocal %330 : vector<1x8x1xf32> -> vector<1x8x1xf32>
    %332 = vector.broadcast %331 : vector<1x8x1xf32> to vector<1x8x16xf32>
    %333 = arith.mulf %328, %332 : vector<1x8x16xf32>
    %334 = arith.truncf %333 : vector<1x8x16xf32> to vector<1x8x16xbf16>
    "tpu.trace_start"() <{level = 10 : i32, message = "bij,bjd->bid"}> : () -> ()
    %cst_103 = arith.constant dense<0.000000e+00> : vector<1x8x32xf32>
    %335 = tpu.matmul %334, %58, %cst_103 {dimension_numbers = #tpu.dot_dimension_numbers<[2], [1], [1], [2], [0, 0, 0, 1, 1, 2], [0], [0]>} : vector<1x8x16xbf16>, vector<1x16x32xbf16>, vector<1x8x32xf32> -> vector<1x8x32xf32>
    "tpu.trace_stop"() : () -> ()
    %336 = vector.shape_cast %335 : vector<1x8x32xf32> to vector<8x32xf32>
    %337 = tpu.concatenate %336, %287 in 1 : vector<8x32xf32>, vector<8x32xf32> -> vector<8x64xf32>
    %338 = arith.truncf %337 : vector<8x64xf32> to vector<8x64xbf16>
    %cst_104 = arith.constant dense<0.000000e+00> : vector<8x96xf32>
    %339 = tpu.matmul %338, %9, %cst_104 {dimension_numbers = #tpu.dot_dimension_numbers<[1], [0], [0], [1], [0, 0, 1, 1], [], []>} : vector<8x64xbf16>, vector<64x96xbf16>, vector<8x96xf32> -> vector<8x96xf32>
    %340 = vector.broadcast %17 : vector<1x96xf32> to vector<8x96xf32>
    %341 = arith.addf %339, %340 : vector<8x96xf32>
    %342 = arith.truncf %287 : vector<8x32xf32> to vector<8x32xbf16>
    %cst_105 = arith.constant dense<0.000000e+00> : vector<8x32xf32>
    %343 = tpu.matmul %342, %11, %cst_105 {dimension_numbers = #tpu.dot_dimension_numbers<[1], [0], [0], [1], [0, 0, 1, 1], [], []>} : vector<8x32xbf16>, vector<32x32xbf16>, vector<8x32xf32> -> vector<8x32xf32>
    %344 = vector.broadcast %18 : vector<1x32xf32> to vector<8x32xf32>
    %345 = arith.addf %343, %344 : vector<8x32xf32>
    %346 = vector.extract_strided_slice %341 {offsets = [0, 0], sizes = [8, 32], strides = [1, 1]} : vector<8x96xf32> to vector<8x32xf32>
    %347 = arith.negf %346 : vector<8x32xf32>
    %348 = math.exp %347 : vector<8x32xf32>
    %cst_106 = arith.constant 1.000000e+00 : f32
    %349 = vector.broadcast %cst_106 : f32 to vector<8x32xf32>
    %350 = arith.addf %349, %348 : vector<8x32xf32>
    %351 = arith.divf %349, %350 : vector<8x32xf32>
    %352 = vector.extract_strided_slice %341 {offsets = [0, 32], sizes = [8, 32], strides = [1, 1]} : vector<8x96xf32> to vector<8x32xf32>
    %353 = arith.negf %352 : vector<8x32xf32>
    %354 = math.exp %353 : vector<8x32xf32>
    %cst_107 = arith.constant 1.000000e+00 : f32
    %355 = vector.broadcast %cst_107 : f32 to vector<8x32xf32>
    %356 = arith.addf %355, %354 : vector<8x32xf32>
    %357 = arith.divf %355, %356 : vector<8x32xf32>
    %358 = vector.extract_strided_slice %341 {offsets = [0, 64], sizes = [8, 32], strides = [1, 1]} : vector<8x96xf32> to vector<8x32xf32>
    %cst_108 = arith.constant 1.000000e+00 : f32
    %359 = vector.broadcast %cst_108 : f32 to vector<8x32xf32>
    %360 = arith.subf %351, %359 : vector<8x32xf32>
    %361 = arith.mulf %360, %345 : vector<8x32xf32>
    %362 = arith.addf %358, %361 : vector<8x32xf32>
    %363 = math.tanh %362 : vector<8x32xf32>
    %cst_109 = arith.constant 1.000000e+00 : f32
    %364 = vector.broadcast %cst_109 : f32 to vector<8x32xf32>
    %365 = arith.subf %364, %357 : vector<8x32xf32>
    %366 = arith.mulf %365, %363 : vector<8x32xf32>
    %367 = arith.mulf %357, %287 : vector<8x32xf32>
    %368 = arith.addf %366, %367 : vector<8x32xf32>
    %cst_110 = arith.constant dense<0.000000e+00> : vector<8xf32>
    %369 = vector.multi_reduction <add>, %368, %cst_110 [1] : vector<8x32xf32> to vector<8xf32>
    %370 = vector.shape_cast %369 : vector<8xf32> to vector<8x1xf32>
    %cst_111 = arith.constant 3.200000e+01 : f32
    %371 = vector.broadcast %cst_111 : f32 to vector<8x1xf32>
    %372 = arith.divf %370, %371 : vector<8x1xf32>
    %373 = vector.broadcast %372 : vector<8x1xf32> to vector<8x32xf32>
    %374 = arith.subf %368, %373 : vector<8x32xf32>
    %375 = arith.mulf %374, %374 : vector<8x32xf32>
    %cst_112 = arith.constant dense<0.000000e+00> : vector<8xf32>
    %376 = vector.multi_reduction <add>, %375, %cst_112 [1] : vector<8x32xf32> to vector<8xf32>
    %377 = vector.shape_cast %376 : vector<8xf32> to vector<8x1xf32>
    %cst_113 = arith.constant 3.200000e+01 : f32
    %378 = vector.broadcast %cst_113 : f32 to vector<8x1xf32>
    %379 = arith.divf %377, %378 : vector<8x1xf32>
    %380 = vector.broadcast %372 : vector<8x1xf32> to vector<8x32xf32>
    %381 = arith.subf %368, %380 : vector<8x32xf32>
    %cst_114 = arith.constant 9.99999974E-6 : f32
    %382 = vector.broadcast %cst_114 : f32 to vector<8x1xf32>
    %383 = arith.addf %379, %382 : vector<8x1xf32>
    %384 = math.rsqrt %383 : vector<8x1xf32>
    %385 = vector.broadcast %384 : vector<8x1xf32> to vector<8x32xf32>
    %386 = arith.mulf %381, %385 : vector<8x32xf32>
    %387 = vector.broadcast %4 : vector<1x32xf32> to vector<8x32xf32>
    %388 = arith.mulf %386, %387 : vector<8x32xf32>
    %389 = vector.broadcast %5 : vector<1x32xf32> to vector<8x32xf32>
    %390 = arith.addf %388, %389 : vector<8x32xf32>
    %391 = arith.truncf %390 : vector<8x32xf32> to vector<8x32xbf16>
    %cst_115 = arith.constant dense<0.000000e+00> : vector<8x128xf32>
    %392 = tpu.matmul %391, %13, %cst_115 {dimension_numbers = #tpu.dot_dimension_numbers<[1], [0], [0], [1], [0, 0, 1, 1], [], []>} : vector<8x32xbf16>, vector<32x128xbf16>, vector<8x128xf32> -> vector<8x128xf32>
    %393 = vector.broadcast %19 : vector<1x128xf32> to vector<8x128xf32>
    %394 = arith.addf %392, %393 : vector<8x128xf32>
    %cst_116 = arith.constant 0.000000e+00 : f32
    %395 = vector.broadcast %cst_116 : f32 to vector<8x128xf32>
    %396 = arith.maximumf %394, %395 : vector<8x128xf32>
    %397 = arith.truncf %396 : vector<8x128xf32> to vector<8x128xbf16>
    %cst_117 = arith.constant dense<0.000000e+00> : vector<8x32xf32>
    %398 = tpu.matmul %397, %15, %cst_117 {dimension_numbers = #tpu.dot_dimension_numbers<[1], [0], [0], [1], [0, 0, 1, 1], [], []>} : vector<8x128xbf16>, vector<128x32xbf16>, vector<8x32xf32> -> vector<8x32xf32>
    %399 = arith.addf %368, %398 : vector<8x32xf32>
    %400 = vector.broadcast %20 : vector<1x32xf32> to vector<8x32xf32>
    %401 = arith.addf %399, %400 : vector<8x32xf32>
    %402 = vector.shape_cast %401 : vector<8x32xf32> to vector<1x8x32xf32>
    %c0_118 = arith.constant 0 : index
    %c0_119 = arith.constant 0 : index
    %c0_120 = arith.constant 0 : index
    %403 = vector.load %arg16[%c0_118, %c0_119, %c0_120] : memref<1x8x32xf32, #tpu.memory_space<vmem>>, vector<1x8x32xf32>
    tpu.vector_store %arg16[%c0_118, %c0_119, %c0_120], %402 {strides = array<i32>} : memref<1x8x32xf32, #tpu.memory_space<vmem>>, vector<1x8x32xf32>,
    return
  }
  func.func @transform_0(%arg0: i32) -> (i32, i32, i32) {
    %c0_i32 = arith.constant 0 : i32
    %c0_i32_0 = arith.constant 0 : i32
    %c0_i32_1 = arith.constant 0 : i32
    return %arg0, %c0_i32, %c0_i32_0 : i32, i32, i32
  }
  func.func @transform_1(%arg0: i32) -> (i32, i32) {
    %c0_i32 = arith.constant 0 : i32
    %c0_i32_0 = arith.constant 0 : i32
    %c0_i32_1 = arith.constant 0 : i32
    return %c0_i32, %c0_i32_0 : i32, i32
  }
  func.func @transform_2(%arg0: i32) -> (i32, i32) {
    %c0_i32 = arith.constant 0 : i32
    %c0_i32_0 = arith.constant 0 : i32
    %c0_i32_1 = arith.constant 0 : i32
    return %c0_i32, %c0_i32_0 : i32, i32
  }
  func.func @transform_3(%arg0: i32) -> (i32, i32) {
    %c0_i32 = arith.constant 0 : i32
    %c0_i32_0 = arith.constant 0 : i32
    %c0_i32_1 = arith.constant 0 : i32
    return %c0_i32, %c0_i32_0 : i32, i32
  }
  func.func @transform_4(%arg0: i32) -> (i32, i32) {
    %c0_i32 = arith.constant 0 : i32
    %c0_i32_0 = arith.constant 0 : i32
    %c0_i32_1 = arith.constant 0 : i32
    return %c0_i32, %c0_i32_0 : i32, i32
  }
  func.func @transform_5(%arg0: i32) -> (i32, i32) {
    %c0_i32 = arith.constant 0 : i32
    %c0_i32_0 = arith.constant 0 : i32
    %c0_i32_1 = arith.constant 0 : i32
    return %c0_i32, %c0_i32_0 : i32, i32
  }
  func.func @transform_6(%arg0: i32) -> (i32, i32) {
    %c0_i32 = arith.constant 0 : i32
    %c0_i32_0 = arith.constant 0 : i32
    %c0_i32_1 = arith.constant 0 : i32
    return %c0_i32, %c0_i32_0 : i32, i32
  }
  func.func @transform_7(%arg0: i32) -> (i32, i32) {
    %c0_i32 = arith.constant 0 : i32
    %c0_i32_0 = arith.constant 0 : i32
    %c0_i32_1 = arith.constant 0 : i32
    return %c0_i32, %c0_i32_0 : i32, i32
  }
  func.func @transform_8(%arg0: i32) -> (i32, i32) {
    %c0_i32 = arith.constant 0 : i32
    %c0_i32_0 = arith.constant 0 : i32
    %c0_i32_1 = arith.constant 0 : i32
    return %c0_i32, %c0_i32_0 : i32, i32
  }
  func.func @transform_9(%arg0: i32) -> (i32, i32) {
    %c0_i32 = arith.constant 0 : i32
    %c0_i32_0 = arith.constant 0 : i32
    %c0_i32_1 = arith.constant 0 : i32
    return %c0_i32, %c0_i32_0 : i32, i32
  }
  func.func @transform_10(%arg0: i32) -> (i32, i32) {
    %c0_i32 = arith.constant 0 : i32
    %c0_i32_0 = arith.constant 0 : i32
    %c0_i32_1 = arith.constant 0 : i32
    return %c0_i32, %c0_i32_0 : i32, i32
  }
  func.func @transform_11(%arg0: i32) -> (i32, i32) {
    %c0_i32 = arith.constant 0 : i32
    %c0_i32_0 = arith.constant 0 : i32
    %c0_i32_1 = arith.constant 0 : i32
    return %c0_i32, %c0_i32_0 : i32, i32
  }
  func.func @transform_12(%arg0: i32) -> (i32, i32) {
    %c0_i32 = arith.constant 0 : i32
    %c0_i32_0 = arith.constant 0 : i32
    %c0_i32_1 = arith.constant 0 : i32
    return %c0_i32, %c0_i32_0 : i32, i32
  }
  func.func @transform_13(%arg0: i32) -> (i32, i32) {
    %c0_i32 = arith.constant 0 : i32
    %c0_i32_0 = arith.constant 0 : i32
    %c0_i32_1 = arith.constant 0 : i32
    return %c0_i32, %c0_i32_0 : i32, i32
  }
  func.func @transform_14(%arg0: i32) -> (i32, i32) {
    %c0_i32 = arith.constant 0 : i32
    %c0_i32_0 = arith.constant 0 : i32
    %c0_i32_1 = arith.constant 0 : i32
    return %c0_i32, %c0_i32_0 : i32, i32
  }
  func.func @transform_15(%arg0: i32) -> (i32, i32, i32) {
    %c0_i32 = arith.constant 0 : i32
    %c0_i32_0 = arith.constant 0 : i32
    %c0_i32_1 = arith.constant 0 : i32
    return %arg0, %c0_i32, %c0_i32_0 : i32, i32, i32
  }
}

</mosaic_0001>

<llo_original>
// kernel: tpu_custom_call.1
$region0: #{tpu_custom_call.1}
  #allocation0 [shape = 'u32[]', space=smem, size = 0x4, offset = 0x4, fixed_abs, tag = 'smem constant byte address 0x4 - core index']
  #allocation1 [shape = 'u32[72,128]{1,0:T(1,128)}', space=vmem, size = 0x9000, scoped, tag = 'internal scratch']
  %s0 = inlined_call_operand.hbm [shape: bf16[2,16,32], index: 0, kind: input, shape index: {}]
  %s1 = inlined_call_operand.hbm [shape: f32[8,32], index: 1, kind: input, shape index: {}]
  %s2 = inlined_call_operand.hbm [shape: f32[6,32], index: 2, kind: input, shape index: {}]
  %s3 = inlined_call_operand.vmem [shape: f32[32,64], index: 3, kind: input, shape index: {}]
  %s4 = inlined_call_operand.vmem [shape: f32[1,64], index: 4, kind: input, shape index: {}]
  %s5 = inlined_call_operand.vmem [shape: f32[32,32], index: 5, kind: input, shape index: {}]
  %s6 = inlined_call_operand.vmem [shape: f32[1,32], index: 6, kind: input, shape index: {}]
  %s7 = inlined_call_operand.vmem [shape: f32[64,96], index: 7, kind: input, shape index: {}]
  %s8 = inlined_call_operand.vmem [shape: f32[1,96], index: 8, kind: input, shape index: {}]
  %s9 = inlined_call_operand.vmem [shape: f32[32,32], index: 9, kind: input, shape index: {}]
  %s10 = inlined_call_operand.vmem [shape: f32[1,32], index: 10, kind: input, shape index: {}]
  %s11 = inlined_call_operand.hbm [shape: f32[32,128], index: 11, kind: input, shape index: {}]
  %s12 = inlined_call_operand.vmem [shape: f32[1,128], index: 12, kind: input, shape index: {}]
  %s13 = inlined_call_operand.vmem [shape: f32[128,32], index: 13, kind: input, shape index: {}]
  %s14 = inlined_call_operand.vmem [shape: f32[1,32], index: 14, kind: input, shape index: {}]
  %s15 = inlined_call_operand.hbm [shape: f32[2,8,32], index: 15, kind: output, shape index: {}]
  %s16 = sld [smem:[#allocation0]]
  $region109: #{tpu_custom_call.1} parent=0
    _
  %s18 = ssub.s32 1, %s16
  %s19 = scalar_select 0, %s18, %s16
  $region1: #{tpu_custom_call.1} parent=0
    #allocation2 [shape = 'u8[8192]{0}', space=vmem, size = 0x2000, scoped, tag = 'input window, operand 0']
    #allocation3 [shape = 's32[2]{0}', space=sflag, size = 0x8, scoped, tag = 'scoped memory for tpu_custom_call.1']
    #allocation4 [shape = 's32[2]{0}', space=sflag, size = 0x8, scoped, tag = 'scoped memory for tpu_custom_call.1']
    #allocation5 [shape = 'u8[4096]{0}', space=vmem, size = 0x1000, scoped, tag = 'input window, operand 1, single buffered']
    #allocation6 [shape = 's32[1]{0}', space=sflag, size = 0x4, scoped, tag = 'scoped memory for tpu_custom_call.1']
    #allocation7 [shape = 'u8[4096]{0}', space=vmem, size = 0x1000, scoped, tag = 'input window, operand 2, single buffered']
    #allocation8 [shape = 'u8[16384]{0}', space=vmem, size = 0x4000, scoped, tag = 'input window, operand 11, single buffered']
    #allocation9 [shape = 's32[1]{0}', space=sflag, size = 0x4, scoped, tag = 'scoped memory for tpu_custom_call.1']
    #allocation10 [shape = 'u8[8192]{0}', space=vmem, size = 0x2000, scoped, tag = 'output window, operand 0']
    %20 = vsyncpa [#allocation3], 0
    %s21 = scalar_lea.sflag [#allocation3], 1
    %22 = vsyncpa %s21, 0
    %23 = vsyncpa [#allocation6], 0
    %24 = vsyncpa [#allocation9], 0
    %25 = vsyncpa [#allocation4], 0
    %s26 = scalar_lea.sflag [#allocation4], 1
    %27 = vsyncpa %s26, 0
    loop: start=0, step=1, limit=4
    $region2: #{tpu_custom_call.1} parent=1 // loop_pre_header
      _
    $region3: #{tpu_custom_call.1} parent=1 // loop_header
      %s29 = sphi 0, %s33
      %p30 = scmp.ge.s32.totalorder %s29, 4
      %s39 = sphi 0, %s41
      %s42 = sphi 0, %s39
      %s43 = sphi 0, %s42
      %s59 = sphi 0, %s43
      %s63 = sphi 0, %s63
      %s65 = sphi 0, %s63
      %s66 = sphi 0, %s65
      %s80 = sphi 0, %s66
      %s84 = sphi 0, %s84
      %s86 = sphi 0, %s84
      %s87 = sphi 0, %s86
      %s101 = sphi 0, %s87
      %s105 = sphi 0, %s105
      %s107 = sphi 0, %s105
      %s108 = sphi 0, %s107
      %s122 = sphi 0, %s108
      %s126 = sphi 0, %s126
      %s128 = sphi 0, %s126
      %s129 = sphi 0, %s128
      %s143 = sphi 0, %s129
      %s147 = sphi 0, %s147
      %s149 = sphi 0, %s147
      %s150 = sphi 0, %s149
      %s164 = sphi 0, %s150
      %s168 = sphi 0, %s168
      %s170 = sphi 0, %s168
      %s171 = sphi 0, %s170
      %s185 = sphi 0, %s171
      %s189 = sphi 0, %s189
      %s191 = sphi 0, %s189
      %s192 = sphi 0, %s191
      %s206 = sphi 0, %s192
      %s210 = sphi 0, %s210
      %s212 = sphi 0, %s210
      %s213 = sphi 0, %s212
      %s227 = sphi 0, %s213
      %s231 = sphi 0, %s231
      %s233 = sphi 0, %s231
      %s234 = sphi 0, %s233
      %s248 = sphi 0, %s234
      %s252 = sphi 0, %s252
      %s254 = sphi 0, %s252
      %s255 = sphi 0, %s254
      %s269 = sphi 0, %s255
      %s273 = sphi 0, %s273
      %s275 = sphi 0, %s273
      %s276 = sphi 0, %s275
      %s290 = sphi 0, %s276
      %s294 = sphi 0, %s294
      %s296 = sphi 0, %s294
      %s297 = sphi 0, %s296
      %s311 = sphi 0, %s297
      %s315 = sphi 0, %s315
      %s317 = sphi 0, %s315
      %s318 = sphi 0, %s317
      %s332 = sphi 0, %s318
      %s336 = sphi 0, %s336
      %s338 = sphi 0, %s336
      %s339 = sphi 0, %s338
      %s353 = sphi 0, %s339
      %s359 = sphi 0, %s361
      %s362 = sphi 0, %s359
      %s363 = sphi 0, %s362
      %s379 = sphi 0, %s363
    $region4: #{tpu_custom_call.1} parent=1 // loop_header_branch
      %32 = sbr.rel (%p30) target = $region8
    $region5: #{tpu_custom_call.1} parent=1 // loop_body
      %s34 = ssub.s32 %s29, 1
      %s35 = ssub.s32 %s29, 2
      %s36 = sadd.s32 %s29, 1
      %s37 = ssub.s32 %s29, %s36
      %p38 = scmp.eq.s32.totalorder %s37, 0
      %s40 = sadd.s32 %s39, 1
      %s41 = scalar_select %p38, %s39, %s40
      %p44 = pneg %p38
      %p45 = scmp.eq.s32.totalorder %s29, 1
      %p46 = por %p44, %p45
      %p47 = scmp.ne.s32.totalorder %s39, %s42
      %p48 = scmp.eq.s32.totalorder %s29, 0
      %p49 = por %p47, %p48
      %p50 = scmp.ne.s32.totalorder %s39, %s42
      %p51 = scmp.eq.s32.totalorder %s34, 1
      %p52 = por %p50, %p51
      %p53 = scmp.ne.s32.totalorder %s42, %s43
      %p54 = scmp.eq.s32.totalorder %s34, 0
      %p55 = por %p53, %p54
      %p56 = scmp.ne.s32.totalorder %s42, %s43
      %p57 = scmp.eq.s32.totalorder %s35, 1
      %p58 = por %p56, %p57
      %p60 = scmp.ne.s32.totalorder %s43, %s59
      %p61 = scmp.eq.s32.totalorder %s35, 0
      %p62 = por %p60, %p61
      %s64 = sadd.s32 %s63, 1
      %p67 = scmp.eq.s32.totalorder %s29, 1
      %p68 = scmp.ne.s32.totalorder %s63, %s65
      %p69 = scmp.eq.s32.totalorder %s29, 0
      %p70 = por %p68, %p69
      %p71 = scmp.ne.s32.totalorder %s63, %s65
      %p72 = scmp.eq.s32.totalorder %s34, 1
      %p73 = por %p71, %p72
      %p74 = scmp.ne.s32.totalorder %s65, %s66
      %p75 = scmp.eq.s32.totalorder %s34, 0
      %p76 = por %p74, %p75
      %p77 = scmp.ne.s32.totalorder %s65, %s66
      %p78 = scmp.eq.s32.totalorder %s35, 1
      %p79 = por %p77, %p78
      %p81 = scmp.ne.s32.totalorder %s66, %s80
      %p82 = scmp.eq.s32.totalorder %s35, 0
      %p83 = por %p81, %p82
      %s85 = sadd.s32 %s84, 1
      %p88 = scmp.eq.s32.totalorder %s29, 1
      %p89 = scmp.ne.s32.totalorder %s84, %s86
      %p90 = scmp.eq.s32.totalorder %s29, 0
      %p91 = por %p89, %p90
      %p92 = scmp.ne.s32.totalorder %s84, %s86
      %p93 = scmp.eq.s32.totalorder %s34, 1
      %p94 = por %p92, %p93
      %p95 = scmp.ne.s32.totalorder %s86, %s87
      %p96 = scmp.eq.s32.totalorder %s34, 0
      %p97 = por %p95, %p96
      %p98 = scmp.ne.s32.totalorder %s86, %s87
      %p99 = scmp.eq.s32.totalorder %s35, 1
      %p100 = por %p98, %p99
      %p102 = scmp.ne.s32.totalorder %s87, %s101
      %p103 = scmp.eq.s32.totalorder %s35, 0
      %p104 = por %p102, %p103
      %s106 = sadd.s32 %s105, 1
      %p109 = scmp.eq.s32.totalorder %s29, 1
      %p110 = scmp.ne.s32.totalorder %s105, %s107
      %p111 = scmp.eq.s32.totalorder %s29, 0
      %p112 = por %p110, %p111
      %p113 = scmp.ne.s32.totalorder %s105, %s107
      %p114 = scmp.eq.s32.totalorder %s34, 1
      %p115 = por %p113, %p114
      %p116 = scmp.ne.s32.totalorder %s107, %s108
      %p117 = scmp.eq.s32.totalorder %s34, 0
      %p118 = por %p116, %p117
      %p119 = scmp.ne.s32.totalorder %s107, %s108
      %p120 = scmp.eq.s32.totalorder %s35, 1
      %p121 = por %p119, %p120
      %p123 = scmp.ne.s32.totalorder %s108, %s122
      %p124 = scmp.eq.s32.totalorder %s35, 0
      %p125 = por %p123, %p124
      %s127 = sadd.s32 %s126, 1
      %p130 = scmp.eq.s32.totalorder %s29, 1
      %p131 = scmp.ne.s32.totalorder %s126, %s128
      %p132 = scmp.eq.s32.totalorder %s29, 0
      %p133 = por %p131, %p132
      %p134 = scmp.ne.s32.totalorder %s126, %s128
      %p135 = scmp.eq.s32.totalorder %s34, 1
      %p136 = por %p134, %p135
      %p137 = scmp.ne.s32.totalorder %s128, %s129
      %p138 = scmp.eq.s32.totalorder %s34, 0
      %p139 = por %p137, %p138
      %p140 = scmp.ne.s32.totalorder %s128, %s129
      %p141 = scmp.eq.s32.totalorder %s35, 1
      %p142 = por %p140, %p141
      %p144 = scmp.ne.s32.totalorder %s129, %s143
      %p145 = scmp.eq.s32.totalorder %s35, 0
      %p146 = por %p144, %p145
      %s148 = sadd.s32 %s147, 1
      %p151 = scmp.eq.s32.totalorder %s29, 1
      %p152 = scmp.ne.s32.totalorder %s147, %s149
      %p153 = scmp.eq.s32.totalorder %s29, 0
      %p154 = por %p152, %p153
      %p155 = scmp.ne.s32.totalorder %s147, %s149
      %p156 = scmp.eq.s32.totalorder %s34, 1
      %p157 = por %p155, %p156
      %p158 = scmp.ne.s32.totalorder %s149, %s150
      %p159 = scmp.eq.s32.totalorder %s34, 0
      %p160 = por %p158, %p159
      %p161 = scmp.ne.s32.totalorder %s149, %s150
      %p162 = scmp.eq.s32.totalorder %s35, 1
      %p163 = por %p161, %p162
      %p165 = scmp.ne.s32.totalorder %s150, %s164
      %p166 = scmp.eq.s32.totalorder %s35, 0
      %p167 = por %p165, %p166
      %s169 = sadd.s32 %s168, 1
      %p172 = scmp.eq.s32.totalorder %s29, 1
      %p173 = scmp.ne.s32.totalorder %s168, %s170
      %p174 = scmp.eq.s32.totalorder %s29, 0
      %p175 = por %p173, %p174
      %p176 = scmp.ne.s32.totalorder %s168, %s170
      %p177 = scmp.eq.s32.totalorder %s34, 1
      %p178 = por %p176, %p177
      %p179 = scmp.ne.s32.totalorder %s170, %s171
      %p180 = scmp.eq.s32.totalorder %s34, 0
      %p181 = por %p179, %p180
      %p182 = scmp.ne.s32.totalorder %s170, %s171
      %p183 = scmp.eq.s32.totalorder %s35, 1
      %p184 = por %p182, %p183
      %p186 = scmp.ne.s32.totalorder %s171, %s185
      %p187 = scmp.eq.s32.totalorder %s35, 0
      %p188 = por %p186, %p187
      %s190 = sadd.s32 %s189, 1
      %p193 = scmp.eq.s32.totalorder %s29, 1
      %p194 = scmp.ne.s32.totalorder %s189, %s191
      %p195 = scmp.eq.s32.totalorder %s29, 0
      %p196 = por %p194, %p195
      %p197 = scmp.ne.s32.totalorder %s189, %s191
      %p198 = scmp.eq.s32.totalorder %s34, 1
      %p199 = por %p197, %p198
      %p200 = scmp.ne.s32.totalorder %s191, %s192
      %p201 = scmp.eq.s32.totalorder %s34, 0
      %p202 = por %p200, %p201
      %p203 = scmp.ne.s32.totalorder %s191, %s192
      %p204 = scmp.eq.s32.totalorder %s35, 1
      %p205 = por %p203, %p204
      %p207 = scmp.ne.s32.totalorder %s192, %s206
      %p208 = scmp.eq.s32.totalorder %s35, 0
      %p209 = por %p207, %p208
      %s211 = sadd.s32 %s210, 1
      %p214 = scmp.eq.s32.totalorder %s29, 1
      %p215 = scmp.ne.s32.totalorder %s210, %s212
      %p216 = scmp.eq.s32.totalorder %s29, 0
      %p217 = por %p215, %p216
      %p218 = scmp.ne.s32.totalorder %s210, %s212
      %p219 = scmp.eq.s32.totalorder %s34, 1
      %p220 = por %p218, %p219
      %p221 = scmp.ne.s32.totalorder %s212, %s213
      %p222 = scmp.eq.s32.totalorder %s34, 0
      %p223 = por %p221, %p222
      %p224 = scmp.ne.s32.totalorder %s212, %s213
      %p225 = scmp.eq.s32.totalorder %s35, 1
      %p226 = por %p224, %p225
      %p228 = scmp.ne.s32.totalorder %s213, %s227
      %p229 = scmp.eq.s32.totalorder %s35, 0
      %p230 = por %p228, %p229
      %s232 = sadd.s32 %s231, 1
      %p235 = scmp.eq.s32.totalorder %s29, 1
      %p236 = scmp.ne.s32.totalorder %s231, %s233
      %p237 = scmp.eq.s32.totalorder %s29, 0
      %p238 = por %p236, %p237
      %p239 = scmp.ne.s32.totalorder %s231, %s233
      %p240 = scmp.eq.s32.totalorder %s34, 1
      %p241 = por %p239, %p240
      %p242 = scmp.ne.s32.totalorder %s233, %s234
      %p243 = scmp.eq.s32.totalorder %s34, 0
      %p244 = por %p242, %p243
      %p245 = scmp.ne.s32.totalorder %s233, %s234
      %p246 = scmp.eq.s32.totalorder %s35, 1
      %p247 = por %p245, %p246
      %p249 = scmp.ne.s32.totalorder %s234, %s248
      %p250 = scmp.eq.s32.totalorder %s35, 0
      %p251 = por %p249, %p250
      %s253 = sadd.s32 %s252, 1
      %p256 = scmp.eq.s32.totalorder %s29, 1
      %p257 = scmp.ne.s32.totalorder %s252, %s254
      %p258 = scmp.eq.s32.totalorder %s29, 0
      %p259 = por %p257, %p258
      %p260 = scmp.ne.s32.totalorder %s252, %s254
      %p261 = scmp.eq.s32.totalorder %s34, 1
      %p262 = por %p260, %p261
      %p263 = scmp.ne.s32.totalorder %s254, %s255
      %p264 = scmp.eq.s32.totalorder %s34, 0
      %p265 = por %p263, %p264
      %p266 = scmp.ne.s32.totalorder %s254, %s255
      %p267 = scmp.eq.s32.totalorder %s35, 1
      %p268 = por %p266, %p267
      %p270 = scmp.ne.s32.totalorder %s255, %s269
      %p271 = scmp.eq.s32.totalorder %s35, 0
      %p272 = por %p270, %p271
      %s274 = sadd.s32 %s273, 1
      %p277 = scmp.eq.s32.totalorder %s29, 1
      %p278 = scmp.ne.s32.totalorder %s273, %s275
      %p279 = scmp.eq.s32.totalorder %s29, 0
      %p280 = por %p278, %p279
      %p281 = scmp.ne.s32.totalorder %s273, %s275
      %p282 = scmp.eq.s32.totalorder %s34, 1
      %p283 = por %p281, %p282
      %p284 = scmp.ne.s32.totalorder %s275, %s276
      %p285 = scmp.eq.s32.totalorder %s34, 0
      %p286 = por %p284, %p285
      %p287 = scmp.ne.s32.totalorder %s275, %s276
      %p288 = scmp.eq.s32.totalorder %s35, 1
      %p289 = por %p287, %p288
      %p291 = scmp.ne.s32.totalorder %s276, %s290
      %p292 = scmp.eq.s32.totalorder %s35, 0
      %p293 = por %p291, %p292
      %s295 = sadd.s32 %s294, 1
      %p298 = scmp.eq.s32.totalorder %s29, 1
      %p299 = scmp.ne.s32.totalorder %s294, %s296
      %p300 = scmp.eq.s32.totalorder %s29, 0
      %p301 = por %p299, %p300
      %p302 = scmp.ne.s32.totalorder %s294, %s296
      %p303 = scmp.eq.s32.totalorder %s34, 1
      %p304 = por %p302, %p303
      %p305 = scmp.ne.s32.totalorder %s296, %s297
      %p306 = scmp.eq.s32.totalorder %s34, 0
      %p307 = por %p305, %p306
      %p308 = scmp.ne.s32.totalorder %s296, %s297
      %p309 = scmp.eq.s32.totalorder %s35, 1
      %p310 = por %p308, %p309
      %p312 = scmp.ne.s32.totalorder %s297, %s311
      %p313 = scmp.eq.s32.totalorder %s35, 0
      %p314 = por %p312, %p313
      %s316 = sadd.s32 %s315, 1
      %p319 = scmp.eq.s32.totalorder %s29, 1
      %p320 = scmp.ne.s32.totalorder %s315, %s317
      %p321 = scmp.eq.s32.totalorder %s29, 0
      %p322 = por %p320, %p321
      %p323 = scmp.ne.s32.totalorder %s315, %s317
      %p324 = scmp.eq.s32.totalorder %s34, 1
      %p325 = por %p323, %p324
      %p326 = scmp.ne.s32.totalorder %s317, %s318
      %p327 = scmp.eq.s32.totalorder %s34, 0
      %p328 = por %p326, %p327
      %p329 = scmp.ne.s32.totalorder %s317, %s318
      %p330 = scmp.eq.s32.totalorder %s35, 1
      %p331 = por %p329, %p330
      %p333 = scmp.ne.s32.totalorder %s318, %s332
      %p334 = scmp.eq.s32.totalorder %s35, 0
      %p335 = por %p333, %p334
      %s337 = sadd.s32 %s336, 1
      %p340 = scmp.eq.s32.totalorder %s29, 1
      %p341 = scmp.ne.s32.totalorder %s336, %s338
      %p342 = scmp.eq.s32.totalorder %s29, 0
      %p343 = por %p341, %p342
      %p344 = scmp.ne.s32.totalorder %s336, %s338
      %p345 = scmp.eq.s32.totalorder %s34, 1
      %p346 = por %p344, %p345
      %p347 = scmp.ne.s32.totalorder %s338, %s339
      %p348 = scmp.eq.s32.totalorder %s34, 0
      %p349 = por %p347, %p348
      %p350 = scmp.ne.s32.totalorder %s338, %s339
      %p351 = scmp.eq.s32.totalorder %s35, 1
      %p352 = por %p350, %p351
      %p354 = scmp.ne.s32.totalorder %s339, %s353
      %p355 = scmp.eq.s32.totalorder %s35, 0
      %p356 = por %p354, %p355
      %s357 = ssub.s32 %s29, %s36
      %p358 = scmp.eq.s32.totalorder %s357, 0
      %s360 = sadd.s32 %s359, 1
      %s361 = scalar_select %p358, %s359, %s360
      %p364 = pneg %p358
      %p365 = scmp.eq.s32.totalorder %s29, 1
      %p366 = por %p364, %p365
      %p367 = scmp.ne.s32.totalorder %s359, %s362
      %p368 = scmp.eq.s32.totalorder %s29, 0
      %p369 = por %p367, %p368
      %p370 = scmp.ne.s32.totalorder %s359, %s362
      %p371 = scmp.eq.s32.totalorder %s34, 1
      %p372 = por %p370, %p371
      %p373 = scmp.ne.s32.totalorder %s362, %s363
      %p374 = scmp.eq.s32.totalorder %s34, 0
      %p375 = por %p373, %p374
      %p376 = scmp.ne.s32.totalorder %s362, %s363
      %p377 = scmp.eq.s32.totalorder %s35, 1
      %p378 = por %p376, %p377
      %p380 = scmp.ne.s32.totalorder %s363, %s379
      %p381 = scmp.eq.s32.totalorder %s35, 0
      %p382 = por %p380, %p381
      %p383 = scmp.le.s32.totalorder 1, %s29
      %p384 = scmp.lt.s32.totalorder %s29, 3
      %p385 = pnand %p383, %p384
      %p386 = pneg %p385
      // Predicated region
      $region9: #{tpu_custom_call.1} parent=5 // pred_check
        _
      $region10: #{tpu_custom_call.1} parent=5 // pred_check_branch
        %388 = sbr.rel (%p385) target = $region12
      $region11: #{tpu_custom_call.1} parent=5 // pred_region
        %s389 = ssub.s32 %s29, 1
        // Predicated region
        $region13: #{tpu_custom_call.1} parent=11 // pred_check
          %p390 = pneg %p76
        $region14: #{tpu_custom_call.1} parent=11 // pred_check_branch
          %392 = sbr.rel (%p390) target = $region16
        $region15: #{tpu_custom_call.1} parent=11 // pred_region
          %394 = vsyncadd [#allocation6], 0
          %s396 = sshll.u32 %s1, 4
          %s397 = int_to_ptr.hbm [resolvable:$true] %s396
          %s398 = sshll.u32 [#allocation5], 4
          %s399 = int_to_ptr.vmem [resolvable:$true] %s398
          %401 = dma.hbm_to_vmem [thread:$0]  %s397, 128, %s399, [#allocation6]
        $region16: #{tpu_custom_call.1} parent=11 // pred_fallthru
          _
        // Predicated region
        $region17: #{tpu_custom_call.1} parent=11 // pred_check
          %p402 = pneg %p97
        $region18: #{tpu_custom_call.1} parent=11 // pred_check_branch
          %404 = sbr.rel (%p402) target = $region20
        $region19: #{tpu_custom_call.1} parent=11 // pred_region
          %406 = vsyncadd [#allocation6], 0
          %s408 = sshll.u32 %s2, 4
          %s409 = int_to_ptr.hbm [resolvable:$true] %s408
          %s410 = sshll.u32 [#allocation7], 4
          %s411 = int_to_ptr.vmem [resolvable:$true] %s410
          %413 = dma.hbm_to_vmem [thread:$0]  %s409, 128, %s411, [#allocation6]
        $region20: #{tpu_custom_call.1} parent=11 // pred_fallthru
          _
        // Predicated region
        $region21: #{tpu_custom_call.1} parent=11 // pred_check
          %p414 = pneg %p118
        $region22: #{tpu_custom_call.1} parent=11 // pred_check_branch
          %416 = sbr.rel (%p414) target = $region24
        $region23: #{tpu_custom_call.1} parent=11 // pred_region
          _
        $region24: #{tpu_custom_call.1} parent=11 // pred_fallthru
          _
        // Predicated region
        $region25: #{tpu_custom_call.1} parent=11 // pred_check
          %p417 = pneg %p139
        $region26: #{tpu_custom_call.1} parent=11 // pred_check_branch
          %419 = sbr.rel (%p417) target = $region28
        $region27: #{tpu_custom_call.1} parent=11 // pred_region
          _
        $region28: #{tpu_custom_call.1} parent=11 // pred_fallthru
          _
        // Predicated region
        $region29: #{tpu_custom_call.1} parent=11 // pred_check
          %p420 = pneg %p160
        $region30: #{tpu_custom_call.1} parent=11 // pred_check_branch
          %422 = sbr.rel (%p420) target = $region32
        $region31: #{tpu_custom_call.1} parent=11 // pred_region
          _
        $region32: #{tpu_custom_call.1} parent=11 // pred_fallthru
          _
        // Predicated region
        $region33: #{tpu_custom_call.1} parent=11 // pred_check
          %p423 = pneg %p181
        $region34: #{tpu_custom_call.1} parent=11 // pred_check_branch
          %425 = sbr.rel (%p423) target = $region36
        $region35: #{tpu_custom_call.1} parent=11 // pred_region
          _
        $region36: #{tpu_custom_call.1} parent=11 // pred_fallthru
          _
        // Predicated region
        $region37: #{tpu_custom_call.1} parent=11 // pred_check
          %p426 = pneg %p202
        $region38: #{tpu_custom_call.1} parent=11 // pred_check_branch
          %428 = sbr.rel (%p426) target = $region40
        $region39: #{tpu_custom_call.1} parent=11 // pred_region
          _
        $region40: #{tpu_custom_call.1} parent=11 // pred_fallthru
          _
        // Predicated region
        $region41: #{tpu_custom_call.1} parent=11 // pred_check
          %p429 = pneg %p223
        $region42: #{tpu_custom_call.1} parent=11 // pred_check_branch
          %431 = sbr.rel (%p429) target = $region44
        $region43: #{tpu_custom_call.1} parent=11 // pred_region
          _
        $region44: #{tpu_custom_call.1} parent=11 // pred_fallthru
          _
        // Predicated region
        $region45: #{tpu_custom_call.1} parent=11 // pred_check
          %p432 = pneg %p244
        $region46: #{tpu_custom_call.1} parent=11 // pred_check_branch
          %434 = sbr.rel (%p432) target = $region48
        $region47: #{tpu_custom_call.1} parent=11 // pred_region
          _
        $region48: #{tpu_custom_call.1} parent=11 // pred_fallthru
          _
        // Predicated region
        $region49: #{tpu_custom_call.1} parent=11 // pred_check
          %p435 = pneg %p265
        $region50: #{tpu_custom_call.1} parent=11 // pred_check_branch
          %437 = sbr.rel (%p435) target = $region52
        $region51: #{tpu_custom_call.1} parent=11 // pred_region
          _
        $region52: #{tpu_custom_call.1} parent=11 // pred_fallthru
          _
        // Predicated region
        $region53: #{tpu_custom_call.1} parent=11 // pred_check
          %p438 = pneg %p286
        $region54: #{tpu_custom_call.1} parent=11 // pred_check_branch
          %440 = sbr.rel (%p438) target = $region56
        $region55: #{tpu_custom_call.1} parent=11 // pred_region
          %442 = vsyncadd [#allocation9], 0
          %s443 = sshll.u32 %s11, 4
          %s444 = int_to_ptr.hbm [resolvable:$true] %s443
          %s445 = sshll.u32 [#allocation8], 4
          %s446 = int_to_ptr.vmem [resolvable:$true] %s445
          %451 = dma.hbm_to_vmem [thread:$0]  %s444, 512, %s446, [#allocation9], 128, 128, 8
        $region56: #{tpu_custom_call.1} parent=11 // pred_fallthru
          _
        // Predicated region
        $region57: #{tpu_custom_call.1} parent=11 // pred_check
          %p452 = pneg %p307
        $region58: #{tpu_custom_call.1} parent=11 // pred_check_branch
          %454 = sbr.rel (%p452) target = $region60
        $region59: #{tpu_custom_call.1} parent=11 // pred_region
          _
        $region60: #{tpu_custom_call.1} parent=11 // pred_fallthru
          _
        // Predicated region
        $region61: #{tpu_custom_call.1} parent=11 // pred_check
          %p455 = pneg %p328
        $region62: #{tpu_custom_call.1} parent=11 // pred_check_branch
          %457 = sbr.rel (%p455) target = $region64
        $region63: #{tpu_custom_call.1} parent=11 // pred_region
          _
        $region64: #{tpu_custom_call.1} parent=11 // pred_fallthru
          _
        // Predicated region
        $region65: #{tpu_custom_call.1} parent=11 // pred_check
          %p458 = pneg %p349
        $region66: #{tpu_custom_call.1} parent=11 // pred_check_branch
          %460 = sbr.rel (%p458) target = $region68
        $region67: #{tpu_custom_call.1} parent=11 // pred_region
          _
        $region68: #{tpu_custom_call.1} parent=11 // pred_fallthru
          _
      $region12: #{tpu_custom_call.1} parent=5 // pred_fallthru
        _
      %p461 = scmp.lt.s32.totalorder %s29, 2
      // Predicated region
      $region69: #{tpu_custom_call.1} parent=5 // pred_check
        %p462 = pneg %p461
      $region70: #{tpu_custom_call.1} parent=5 // pred_check_branch
        %464 = sbr.rel (%p462) target = $region72
      $region71: #{tpu_custom_call.1} parent=5 // pred_region
        // Predicated region
        $region73: #{tpu_custom_call.1} parent=71 // pred_check
          %p465 = pneg %p49
        $region74: #{tpu_custom_call.1} parent=71 // pred_check_branch
          %467 = sbr.rel (%p465) target = $region76
        $region75: #{tpu_custom_call.1} parent=71 // pred_region
          %s468 = sand.u32 %s39, 1
          %s469 = scalar_lea.sflag [#allocation3], %s468
          %s470 = sand.u32 %s39, 1
          %s471 = smul.addr %s470, 8
          %s472 = scalar_lea.vmem [#allocation2], %s471
          %474 = vsyncadd %s469, 0
          %s475 = smul.addr %s29, 2
          %s476 = smul.addr %s475, 4
          %s477 = scalar_lea.hbm %s0, %s476
          %s478 = sshll.u32 %s477, 4
          %s479 = int_to_ptr.hbm [resolvable:$true] %s478
          %s480 = sshll.u32 %s472, 4
          %s481 = int_to_ptr.vmem [resolvable:$true] %s480
          %486 = dma.hbm_to_vmem [thread:$0]  %s479, 128, %s481, %s469, 64, 64, 4
        $region76: #{tpu_custom_call.1} parent=71 // pred_fallthru
          _
      $region72: #{tpu_custom_call.1} parent=5 // pred_fallthru
        _
      %p487 = scmp.le.s32.totalorder 1, %s29
      %p488 = scmp.lt.s32.totalorder %s29, 3
      %p489 = pnand %p487, %p488
      %p490 = pneg %p489
      // Predicated region
      $region77: #{tpu_custom_call.1} parent=5 // pred_check
        _
      $region78: #{tpu_custom_call.1} parent=5 // pred_check_branch
        %492 = sbr.rel (%p489) target = $region80
      $region79: #{tpu_custom_call.1} parent=5 // pred_region
        %s493 = ssub.s32 %s29, 1
        %s494 = sand.u32 %s42, 1
        %s495 = scalar_lea.sflag [#allocation3], %s494
        %s496 = sand.u32 %s42, 1
        %s497 = smul.addr %s496, 8
        %s498 = scalar_lea.vmem [#allocation2], %s497
        // Predicated region
        $region81: #{tpu_custom_call.1} parent=79 // pred_check
          %p499 = pneg %p55
        $region82: #{tpu_custom_call.1} parent=79 // pred_check_branch
          %501 = sbr.rel (%p499) target = $region84
        $region83: #{tpu_custom_call.1} parent=79 // pred_region
          %503 = dma.done %s495, 128
        $region84: #{tpu_custom_call.1} parent=79 // pred_fallthru
          _
        // Predicated region
        $region85: #{tpu_custom_call.1} parent=79 // pred_check
          %p504 = pneg %p76
        $region86: #{tpu_custom_call.1} parent=79 // pred_check_branch
          %506 = sbr.rel (%p504) target = $region88
        $region87: #{tpu_custom_call.1} parent=79 // pred_region
          %508 = dma.done [#allocation6], 128
        $region88: #{tpu_custom_call.1} parent=79 // pred_fallthru
          _
        // Predicated region
        $region89: #{tpu_custom_call.1} parent=79 // pred_check
          %p509 = pneg %p97
        $region90: #{tpu_custom_call.1} parent=79 // pred_check_branch
          %511 = sbr.rel (%p509) target = $region92
        $region91: #{tpu_custom_call.1} parent=79 // pred_region
          %513 = dma.done [#allocation6], 128
        $region92: #{tpu_custom_call.1} parent=79 // pred_fallthru
          _
        // Predicated region
        $region93: #{tpu_custom_call.1} parent=79 // pred_check
          %p514 = pneg %p286
        $region94: #{tpu_custom_call.1} parent=79 // pred_check_branch
          %516 = sbr.rel (%p514) target = $region96
        $region95: #{tpu_custom_call.1} parent=79 // pred_region
          %518 = dma.done [#allocation9], 512
        $region96: #{tpu_custom_call.1} parent=79 // pred_fallthru
          _
        %s519 = sand.u32 %s42, 1
        %s520 = scalar_lea.sflag [#allocation3], %s519
        %s521 = sand.u32 %s42, 1
        %s522 = smul.addr %s521, 8
        %s523 = scalar_lea.vmem [#allocation2], %s522
        %p524 = pneg %p55
        %p525 = pneg %p52
        %p526 = pneg %p76
        %p527 = pneg %p73
        %p528 = pneg %p97
        %p529 = pneg %p94
        %p530 = pneg %p118
        %p531 = pneg %p115
        %p532 = pneg %p139
        %p533 = pneg %p136
        %p534 = pneg %p160
        %p535 = pneg %p157
        %p536 = pneg %p181
        %p537 = pneg %p178
        %p538 = pneg %p202
        %p539 = pneg %p199
        %p540 = pneg %p223
        %p541 = pneg %p220
        %p542 = pneg %p244
        %p543 = pneg %p241
        %p544 = pneg %p265
        %p545 = pneg %p262
        %p546 = pneg %p286
        %p547 = pneg %p283
        %p548 = pneg %p307
        %p549 = pneg %p304
        %p550 = pneg %p328
        %p551 = pneg %p325
        %p552 = pneg %p349
        %p553 = pneg %p346
        %p554 = pneg %p375
        %p555 = pneg %p372
        %s556 = sand.u32 %s362, 1
        %s557 = scalar_lea.sflag [#allocation4], %s556
        %s558 = sand.u32 %s362, 1
        %s559 = smul.addr %s558, 8
        %s560 = scalar_lea.vmem [#allocation10], %s559
        %v562 = vld [vmem:[#allocation7] sm:$0x1]
        %v563 = vld [vmem:[#allocation7 + $0x1] sm:$0x1]
        %v564 = vld [vmem:[#allocation7 + $0x2] sm:$0x1]
        %v565 = vld [vmem:[#allocation7 + $0x3] sm:$0x1]
        %v566 = vld [vmem:[#allocation7 + $0x4] sm:$0x1]
        %v567 = vld [vmem:[#allocation7 + $0x5] sm:$0x1]
        %v568 = vld [vmem:[%s5] sm:$0xff]
        %v569 = vld [vmem:[%s5 + $0x8] sm:$0xff]
        %v570 = vld [vmem:[%s5 + $0x10] sm:$0xff]
        %v571 = vld [vmem:[%s5 + $0x18] sm:$0xff]
        %v572 = vpack.c.bf16 %v569, %v568
        %v573 = vpack.c.bf16 %v571, %v570
        %v574 = vld [vmem:[%s7] sm:$0xff]
        %v575 = vld [vmem:[%s7 + $0x8] sm:$0xff]
        %v576 = vld [vmem:[%s7 + $0x10] sm:$0xff]
        %v577 = vld [vmem:[%s7 + $0x18] sm:$0xff]
        %v578 = vld [vmem:[%s7 + $0x20] sm:$0xff]
        %v579 = vld [vmem:[%s7 + $0x28] sm:$0xff]
        %v580 = vld [vmem:[%s7 + $0x30] sm:$0xff]
        %v581 = vld [vmem:[%s7 + $0x38] sm:$0xff]
        %v582 = vpack.c.bf16 %v575, %v574
        %v583 = vpack.c.bf16 %v577, %v576
        %v584 = vpack.c.bf16 %v579, %v578
        %v585 = vpack.c.bf16 %v581, %v580
        %v586 = vld [vmem:[%s9] sm:$0xff]
        %v587 = vld [vmem:[%s9 + $0x8] sm:$0xff]
        %v588 = vld [vmem:[%s9 + $0x10] sm:$0xff]
        %v589 = vld [vmem:[%s9 + $0x18] sm:$0xff]
        %v590 = vpack.c.bf16 %v587, %v586
        %v591 = vpack.c.bf16 %v589, %v588
        %v592 = vld [vmem:[#allocation8] sm:$0xff]
        %v593 = vld [vmem:[#allocation8 + $0x8] sm:$0xff]
        %v594 = vld [vmem:[#allocation8 + $0x10] sm:$0xff]
        %v595 = vld [vmem:[#allocation8 + $0x18] sm:$0xff]
        %v596 = vpack.c.bf16 %v593, %v592
        %v597 = vpack.c.bf16 %v595, %v594
        %v598 = vld [vmem:[%s13] sm:$0xff]
        %v599 = vld [vmem:[%s13 + $0x8] sm:$0xff]
        %v600 = vld [vmem:[%s13 + $0x10] sm:$0xff]
        %v601 = vld [vmem:[%s13 + $0x18] sm:$0xff]
        %v602 = vld [vmem:[%s13 + $0x20] sm:$0xff]
        %v603 = vld [vmem:[%s13 + $0x28] sm:$0xff]
        %v604 = vld [vmem:[%s13 + $0x30] sm:$0xff]
        %v605 = vld [vmem:[%s13 + $0x38] sm:$0xff]
        %v606 = vld [vmem:[%s13 + $0x40] sm:$0xff]
        %v607 = vld [vmem:[%s13 + $0x48] sm:$0xff]
        %v608 = vld [vmem:[%s13 + $0x50] sm:$0xff]
        %v609 = vld [vmem:[%s13 + $0x58] sm:$0xff]
        %v610 = vld [vmem:[%s13 + $0x60] sm:$0xff]
        %v611 = vld [vmem:[%s13 + $0x68] sm:$0xff]
        %v612 = vld [vmem:[%s13 + $0x70] sm:$0xff]
        %v613 = vld [vmem:[%s13 + $0x78] sm:$0xff]
        %v614 = vpack.c.bf16 %v599, %v598
        %v615 = vpack.c.bf16 %v601, %v600
        %v616 = vpack.c.bf16 %v603, %v602
        %v617 = vpack.c.bf16 %v605, %v604
        %v618 = vpack.c.bf16 %v607, %v606
        %v619 = vpack.c.bf16 %v609, %v608
        %v620 = vpack.c.bf16 %v611, %v610
        %v621 = vpack.c.bf16 %v613, %v612
        %v622 = vld [vmem:[%s6] sm:$0x1]
        %v623 = vld [vmem:[%s8] sm:$0x1]
        %v624 = vld [vmem:[%s10] sm:$0x1]
        %v625 = vld [vmem:[%s12] sm:$0x1]
        %v626 = vld [vmem:[%s14] sm:$0x1]
        %v627 = vld [vmem:[%s498] sm:$0xf]
        %v628 = vld [vmem:[%s498 + $0x4] sm:$0xf]
        %v629 = vunpack.c.l.bf16 %v627
        %v630 = vunpack.c.l.bf16 %v628
        %vm631 = vcmask 261120
        %v632 = vsel %vm631, %v629, 0.0
        %633 = vadd.xlane.f32.xlu0 %v632
        %v634 = vpop.xlane.xlu0 %633
        %v635 = vsel %vm631, %v630, 0.0
        %636 = vadd.xlane.f32.xlu0 %v635
        %v637 = vpop.xlane.xlu0 %636
        %v638 = vrcp.pop 32.0
        %v639 = vmul.f32 32.0, %v638
        %v640 = vsub.f32 1.0, %v639
        %v641 = vmul.f32 %v638, %v640
        %v642 = vadd.f32 %v638, %v641
        %vm643 = vweird.f32 %v638
        %v644 = vsel %vm643, %v638, %v642
        %v645 = vmul.f32 %v634, %v644
        %v646 = vmul.f32 %v637, %v644
        %v647 = vsub.f32 %v629, %v645
        %v648 = vsub.f32 %v630, %v646
        %v649 = vmul.f32 %v647, %v647
        %v650 = vmul.f32 %v648, %v648
        %v651 = vsel %vm631, %v649, 0.0
        %652 = vadd.xlane.f32.xlu0 %v651
        %v653 = vpop.xlane.xlu0 %652
        %v654 = vsel %vm631, %v650, 0.0
        %655 = vadd.xlane.f32.xlu0 %v654
        %v656 = vpop.xlane.xlu0 %655
        %v657 = vmul.f32 %v653, %v644
        %v658 = vmul.f32 %v656, %v644
        %v659 = vadd.f32 %v657, 1e-05
        %v660 = vadd.f32 %v658, 1e-05
        %v661 = vrsqrt.pop %v659
        %v662 = vmul.f32 %v661, %v659
        %v663 = vmul.f32 %v662, %v661
        %v664 = vmul.f32 0.5, %v663
        %v665 = vsub.f32 1.5, %v664
        %v666 = vmul.f32 %v661, %v665
        %vm667 = vweird.f32 %v659
        %vm668 = vweird.f32 %v661
        %vm669 = vmor %vm667, %vm668
        %v670 = vsel %vm669, %v661, %v666
        %v671 = vrsqrt.pop %v660
        %v672 = vmul.f32 %v671, %v660
        %v673 = vmul.f32 %v672, %v671
        %v674 = vmul.f32 0.5, %v673
        %v675 = vsub.f32 1.5, %v674
        %v676 = vmul.f32 %v671, %v675
        %vm677 = vweird.f32 %v660
        %vm678 = vweird.f32 %v671
        %vm679 = vmor %vm677, %vm678
        %v680 = vsel %vm679, %v671, %v676
        %v681 = vmul.f32 %v647, %v670
        %v682 = vmul.f32 %v648, %v680
        %v683 = vperm.slane %v562, 0
        %v684 = vmul.f32 %v681, %v683
        %v685 = vmul.f32 %v682, %v683
        %v686 = vperm.slane %v563, 0
        %v687 = vadd.f32 %v684, %v686
        %v688 = vadd.f32 %v685, %v686
        %v689 = vpack.c.bf16 %v688, %v687
        %v690 = vld [vmem:[%s3] sm:$0xff]
        %v691 = vld [vmem:[%s3 + $0x8] sm:$0xff]
        %v692 = vld [vmem:[%s3 + $0x10] sm:$0xff]
        %v693 = vld [vmem:[%s3 + $0x18] sm:$0xff]
        %v694 = vpack.c.bf16 %v691, %v690
        %v695 = vpack.c.bf16 %v693, %v692
        %v696 = vld [vmem:[%s4] sm:$0x1]
        %v698 = vperm.slane %v696, 0
        %v701 = vsel %vm631, %v689, 0
        %703 = vmatpush.bf16.msra.mxu0 0
        %704 = vmatpush.bf16.msra.mxu0 0
        %705 = vmatpush.bf16.msra.mxu0 0
        %706 = vmatpush.bf16.msra.mxu0 0
        %707 = vmatpush.bf16.msra.mxu0 0
        %708 = vmatpush.bf16.msra.mxu0 0
        %709 = vmatpush.bf16.msra.mxu0 %v695
        %710 = vmatpush.bf16.msra.mxu0 %v694
        %711 = vmatmul.bf16.gmra.mxu0 %v701
        %v712 = vpop.f32.mrf.mxu0
        %v713 = vadd.f32 %v698, %v712
        %v714 = vpop.f32.mrf.mxu0
        %v715 = vadd.f32 %v698, %v714
        %716 = vdwg.mxu0
        %v717 = vpack.c.bf16 %v713, %v713
        %v718 = vpack.c.bf16 %v715, %v715
        %v719 = vld [vmem:[#allocation5] sm:$0xff]
        %v720 = vsel %vm631, %v719, 0.0
        %721 = vadd.xlane.f32.xlu0 %v720
        %v722 = vpop.xlane.xlu0 %721
        %v723 = vmul.f32 %v722, %v644
        %v724 = vsub.f32 %v719, %v723
        %v725 = vmul.f32 %v724, %v724
        %v726 = vsel %vm631, %v725, 0.0
        %727 = vadd.xlane.f32.xlu0 %v726
        %v728 = vpop.xlane.xlu0 %727
        %v729 = vmul.f32 %v728, %v644
        %v730 = vadd.f32 %v729, 1e-05
        %v731 = vrsqrt.pop %v730
        %v732 = vmul.f32 %v731, %v730
        %v733 = vmul.f32 %v732, %v731
        %v734 = vmul.f32 0.5, %v733
        %v735 = vsub.f32 1.5, %v734
        %v736 = vmul.f32 %v731, %v735
        %vm737 = vweird.f32 %v730
        %vm738 = vweird.f32 %v731
        %vm739 = vmor %vm737, %vm738
        %v740 = vsel %vm739, %v731, %v736
        %v741 = vmul.f32 %v724, %v740
        %v742 = vperm.slane %v564, 0
        %v743 = vmul.f32 %v741, %v742
        %v744 = vperm.slane %v565, 0
        %v745 = vadd.f32 %v743, %v744
        %v746 = vpack.c.bf16 %v745, %v745
        %v748 = vperm.slane %v622, 0
        %v751 = vsel %vm631, %v746, 0
        %753 = vmatpush.bf16.msra.mxu0 0
        %754 = vmatpush.bf16.msra.mxu0 0
        %755 = vmatpush.bf16.msra.mxu0 0
        %756 = vmatpush.bf16.msra.mxu0 0
        %757 = vmatpush.bf16.msra.mxu0 0
        %758 = vmatpush.bf16.msra.mxu0 0
        %759 = vmatpush.bf16.msra.mxu0 %v573
        %760 = vmatpush.bf16.msra.mxu0 %v572
        %761 = vmatmul.bf16.gmra.mxu0 %v751
        %v762 = vpop.f32.mrf.mxu0
        %v763 = vadd.f32 %v748, %v762
        %v764 = vpop.f32.mrf.mxu0
        %765 = vdwg.mxu0
        %v766 = vpack.c.bf16 %v763, %v763
        %v769 = vunpack.c.l.b16 %v717
        %v770 = vunpack.c.l.b16 %v718
        %v771 = vpack.c.b16 %v770, %v769
        %v773 = vsel %vm631, %v766, 0
        %v776 = vsel %vm631, %v771, 0
        %778 = vmatpush.bf16.xpose.msra.mxu0 0
        %779 = vmatpush.bf16.xpose.msra.mxu0 0
        %780 = vmatpush.bf16.xpose.msra.mxu0 0
        %781 = vmatpush.bf16.xpose.msra.mxu0 0
        %782 = vmatpush.bf16.xpose.msra.mxu0 0
        %783 = vmatpush.bf16.xpose.msra.mxu0 0
        %784 = vmatpush.bf16.xpose.msra.mxu0 0
        %785 = vmatpush.bf16.xpose.msra.mxu0 %v776
        %786 = vmatmul.bf16.gmra.mxu0 %v773
        %v787 = vpop.f32.mrf.mxu0
        %v788 = vadd.f32 0.0, %v787
        %v789 = vpop.f32.mrf.mxu0
        %790 = vdwg.mxu0
        %vm791 = vcmask 130048
        %v792 = vsel %vm791, %v788, -inf
        %v793 = vrot.slane %v792, 4
        %v794 = vmax.f32 %v792, %v793
        %v795 = vrot.slane %v794, 2
        %v796 = vmax.f32 %v794, %v795
        %v797 = vrot.slane %v796, 1
        %v798 = vmax.f32 %v796, %v797
        %v799 = vsub.f32 %v788, %v798
        %v800 = vmul.f32 %v799, 1.442695
        %v801 = vpow.pop %v800
        %v802 = vsel %vm791, %v801, 0.0
        %v803 = vrot.slane %v802, 4
        %v804 = vadd.f32 %v802, %v803
        %v805 = vrot.slane %v804, 2
        %v806 = vadd.f32 %v804, %v805
        %v807 = vrot.slane %v806, 1
        %v808 = vadd.f32 %v806, %v807
        %v809 = vrcp.pop %v808
        %v810 = vmul.f32 %v808, %v809
        %v811 = vsub.f32 1.0, %v810
        %v812 = vmul.f32 %v809, %v811
        %v813 = vadd.f32 %v809, %v812
        %vm814 = vweird.f32 %v808
        %vm815 = vweird.f32 %v809
        %vm816 = vmor %vm814, %vm815
        %v817 = vsel %vm816, %v809, %v813
        %v818 = vand.u32 2147483647, %v808
        %vm819 = vcmp.eq.f32.partialorder %v818, 8.507059e+37
        %v820 = vand.u32 %v808, 2147483648
        %v821 = vor.u32 1.1754944e-38, %v820
        %v822 = vsel %vm819, %v821, %v817
        %v823 = vmul.f32 %v801, %v822
        %v824 = vadd.f32 %v823, 1e-08
        %v825 = vsel %vm791, %v824, 0.0
        %826 = vadd.xlane.f32.xlu0 %v825
        %v827 = vpop.xlane.xlu0 %826
        %v828 = vrcp.pop %v827
        %v829 = vmul.f32 %v827, %v828
        %v830 = vsub.f32 1.0, %v829
        %v831 = vmul.f32 %v828, %v830
        %v832 = vadd.f32 %v828, %v831
        %vm833 = vweird.f32 %v827
        %vm834 = vweird.f32 %v828
        %vm835 = vmor %vm833, %vm834
        %v836 = vsel %vm835, %v828, %v832
        %v837 = vand.u32 2147483647, %v827
        %vm838 = vcmp.eq.f32.partialorder %v837, 8.507059e+37
        %v839 = vand.u32 %v827, 2147483648
        %v840 = vor.u32 1.1754944e-38, %v839
        %v841 = vsel %vm838, %v840, %v836
        %v842 = vmul.f32 %v824, %v841
        %v843 = vpack.c.bf16 %v842, %v842
        %844 = vrot.lane.b32.xlu0 %v771, 96
        %v845 = vpop.permute.xlu0 %844
        %v848 = vsel %vm791, %v843, 0
        %850 = vmatpush.bf16.msra.mxu0 0
        %851 = vmatpush.bf16.msra.mxu0 0
        %852 = vmatpush.bf16.msra.mxu0 0
        %853 = vmatpush.bf16.msra.mxu0 0
        %854 = vmatpush.bf16.msra.mxu0 0
        %855 = vmatpush.bf16.msra.mxu0 0
        %856 = vmatpush.bf16.msra.mxu0 0
        %857 = vmatpush.bf16.msra.mxu0 %v845
        %858 = vmatmul.bf16.gmra.mxu0 %v848
        %v859 = vpop.f32.mrf.mxu0
        %v860 = vadd.f32 0.0, %v859
        %v861 = vpop.f32.mrf.mxu0
        %862 = vdwg.mxu0
        %864 = vrot.lane.b32.xlu0 %v719, 32
        %v865 = vpop.permute.xlu0 %864
        %v867 = vsel %vm631, %v860, %v865
        %v868 = vpack.c.bf16 %v867, %v867
        %v870 = vperm.slane %v623, 0
        %vm872 = vcmask 523264
        %v874 = vsel %vm872, %v868, 0
        %876 = vmatpush.bf16.msra.mxu0 0
        %877 = vmatpush.bf16.msra.mxu0 0
        %878 = vmatpush.bf16.msra.mxu0 0
        %879 = vmatpush.bf16.msra.mxu0 0
        %880 = vmatpush.bf16.msra.mxu0 %v585
        %881 = vmatpush.bf16.msra.mxu0 %v584
        %882 = vmatpush.bf16.msra.mxu0 %v583
        %883 = vmatpush.bf16.msra.mxu0 %v582
        %884 = vmatmul.bf16.gmra.mxu0 %v874
        %v885 = vpop.f32.mrf.mxu0
        %v886 = vadd.f32 %v870, %v885
        %v887 = vpop.f32.mrf.mxu0
        %888 = vdwg.mxu0
        %v889 = vpack.c.bf16 %v719, %v719
        %v891 = vperm.slane %v624, 0
        %v894 = vsel %vm631, %v889, 0
        %896 = vmatpush.bf16.msra.mxu0 0
        %897 = vmatpush.bf16.msra.mxu0 0
        %898 = vmatpush.bf16.msra.mxu0 0
        %899 = vmatpush.bf16.msra.mxu0 0
        %900 = vmatpush.bf16.msra.mxu0 0
        %901 = vmatpush.bf16.msra.mxu0 0
        %902 = vmatpush.bf16.msra.mxu0 %v591
        %903 = vmatpush.bf16.msra.mxu0 %v590
        %904 = vmatmul.bf16.gmra.mxu0 %v894
        %v905 = vpop.f32.mrf.mxu0
        %v906 = vadd.f32 %v891, %v905
        %v907 = vpop.f32.mrf.mxu0
        %908 = vdwg.mxu0
        %v909 = vxor.u32 %v886, 2147483648
        %v910 = vmul.f32 %v909, 1.442695
        %v911 = vpow.pop %v910
        %v912 = vadd.f32 %v911, 1.0
        %v913 = vrcp.pop %v912
        %v914 = vmul.f32 %v912, %v913
        %v915 = vsub.f32 1.0, %v914
        %v916 = vmul.f32 %v913, %v915
        %v917 = vadd.f32 %v913, %v916
        %vm918 = vweird.f32 %v912
        %vm919 = vweird.f32 %v913
        %vm920 = vmor %vm918, %vm919
        %v921 = vsel %vm920, %v913, %v917
        %v922 = vand.u32 2147483647, %v912
        %vm923 = vcmp.eq.f32.partialorder %v922, 8.507059e+37
        %v924 = vand.u32 %v912, 2147483648
        %v925 = vor.u32 1.1754944e-38, %v924
        %v926 = vsel %vm923, %v925, %v921
        %v927 = vmul.f32 1.0, %v926
        %v928 = vsub.f32 %v927, 1.0
        %v929 = vmul.f32 %v928, %v906
        %931 = vrot.lane.b32.xlu0 %v929, 64
        %v932 = vpop.permute.xlu0 %931
        %v934 = vadd.f32 %v886, %v932
        %v935 = vtanh.pop %v934
        %v936 = vsub.f32 1.0, %v927
        %938 = vrot.lane.b32.xlu0 %v935, 96
        %v939 = vpop.permute.xlu0 %938
        %v941 = vmul.f32 %v936, %v939
        %v942 = vmul.f32 %v927, %v865
        %v943 = vadd.f32 %v941, %v942
        %945 = vrot.lane.b32.xlu0 %v943, 96
        %v946 = vpop.permute.xlu0 %945
        %v948 = vsel %vm631, %v946, 0.0
        %949 = vadd.xlane.f32.xlu0 %v948
        %v950 = vpop.xlane.xlu0 %949
        %v951 = vmul.f32 %v950, %v644
        %v952 = vsub.f32 %v943, %v951
        %v953 = vmul.f32 %v952, %v952
        %955 = vrot.lane.b32.xlu0 %v953, 96
        %v956 = vpop.permute.xlu0 %955
        %v958 = vsel %vm631, %v956, 0.0
        %959 = vadd.xlane.f32.xlu0 %v958
        %v960 = vpop.xlane.xlu0 %959
        %v961 = vmul.f32 %v960, %v644
        %v962 = vadd.f32 %v961, 1e-05
        %v963 = vrsqrt.pop %v962
        %v964 = vmul.f32 %v963, %v962
        %v965 = vmul.f32 %v964, %v963
        %v966 = vmul.f32 0.5, %v965
        %v967 = vsub.f32 1.5, %v966
        %v968 = vmul.f32 %v963, %v967
        %vm969 = vweird.f32 %v962
        %vm970 = vweird.f32 %v963
        %vm971 = vmor %vm969, %vm970
        %v972 = vsel %vm971, %v963, %v968
        %v973 = vmul.f32 %v952, %v972
        %v974 = vperm.slane %v566, 0
        %976 = vrot.lane.b32.xlu0 %v974, 32
        %v977 = vpop.permute.xlu0 %976
        %v979 = vmul.f32 %v973, %v977
        %v980 = vperm.slane %v567, 0
        %982 = vrot.lane.b32.xlu0 %v980, 32
        %v983 = vpop.permute.xlu0 %982
        %v985 = vadd.f32 %v979, %v983
        %v986 = vpack.c.bf16 %v985, %v985
        %v988 = vperm.slane %v625, 0
        %991 = vrot.lane.b32.xlu0 %v986, 96
        %v992 = vpop.permute.xlu0 %991
        %v994 = vsel %vm631, %v992, 0
        %996 = vmatpush.bf16.msra.mxu0 0
        %997 = vmatpush.bf16.msra.mxu0 0
        %998 = vmatpush.bf16.msra.mxu0 0
        %999 = vmatpush.bf16.msra.mxu0 0
        %1000 = vmatpush.bf16.msra.mxu0 0
        %1001 = vmatpush.bf16.msra.mxu0 0
        %1002 = vmatpush.bf16.msra.mxu0 %v597
        %1003 = vmatpush.bf16.msra.mxu0 %v596
        %1004 = vmatmul.bf16.gmra.mxu0 %v994
        %v1005 = vpop.f32.mrf.mxu0
        %v1006 = vadd.f32 %v988, %v1005
        %v1007 = vpop.f32.mrf.mxu0
        %1008 = vdwg.mxu0
        %v1009 = vmax.f32 %v1006, 0.0
        %v1010 = vpack.c.bf16 %v1009, %v1009
        %1011 = vmatpush.bf16.msra.mxu0 %v621
        %1012 = vmatpush.bf16.msra.mxu0 %v620
        %1013 = vmatpush.bf16.msra.mxu0 %v619
        %1014 = vmatpush.bf16.msra.mxu0 %v618
        %1015 = vmatpush.bf16.msra.mxu0 %v617
        %1016 = vmatpush.bf16.msra.mxu0 %v616
        %1017 = vmatpush.bf16.msra.mxu0 %v615
        %1018 = vmatpush.bf16.msra.mxu0 %v614
        %1019 = vmatmul.bf16.gmra.mxu0 %v1010
        %v1020 = vpop.f32.mrf.mxu0
        %v1021 = vadd.f32 0.0, %v1020
        %v1022 = vpop.f32.mrf.mxu0
        %1023 = vdwg.mxu0
        %1025 = vrot.lane.b32.xlu0 %v1021, 32
        %v1026 = vpop.permute.xlu0 %1025
        %v1028 = vadd.f32 %v943, %v1026
        %v1030 = vperm.slane %v626, 0
        %1031 = vrot.lane.b32.xlu0 %v1030, 32
        %v1032 = vpop.permute.xlu0 %1031
        %v1034 = vadd.f32 %v1028, %v1032
        %1036 = vrot.lane.b32.xlu0 %v1034, 96
        %v1037 = vpop.permute.xlu0 %1036
        %v1039 = vsel %vm631, %v1037, 0.0
        %1040 = vadd.xlane.f32.xlu0 %v1039
        %v1041 = vpop.xlane.xlu0 %1040
        %v1042 = vmul.f32 %v1041, %v644
        %v1043 = vsub.f32 %v1034, %v1042
        %v1044 = vmul.f32 %v1043, %v1043
        %1046 = vrot.lane.b32.xlu0 %v1044, 96
        %v1047 = vpop.permute.xlu0 %1046
        %v1049 = vsel %vm631, %v1047, 0.0
        %1050 = vadd.xlane.f32.xlu0 %v1049
        %v1051 = vpop.xlane.xlu0 %1050
        %v1052 = vmul.f32 %v1051, %v644
        %v1053 = vadd.f32 %v1052, 1e-05
        %v1054 = vrsqrt.pop %v1053
        %v1055 = vmul.f32 %v1054, %v1053
        %v1056 = vmul.f32 %v1055, %v1054
        %v1057 = vmul.f32 0.5, %v1056
        %v1058 = vsub.f32 1.5, %v1057
        %v1059 = vmul.f32 %v1054, %v1058
        %vm1060 = vweird.f32 %v1053
        %vm1061 = vweird.f32 %v1054
        %vm1062 = vmor %vm1060, %vm1061
        %v1063 = vsel %vm1062, %v1054, %v1059
        %v1064 = vmul.f32 %v1043, %v1063
        %1066 = vrot.lane.b32.xlu0 %v742, 32
        %v1067 = vpop.permute.xlu0 %1066
        %v1069 = vmul.f32 %v1064, %v1067
        %1071 = vrot.lane.b32.xlu0 %v744, 32
        %v1072 = vpop.permute.xlu0 %1071
        %v1074 = vadd.f32 %v1069, %v1072
        %v1075 = vpack.c.bf16 %v1074, %v1074
        %1077 = vrot.lane.b32.xlu0 %v1075, 96
        %v1078 = vpop.permute.xlu0 %1077
        %v1080 = vsel %vm631, %v1078, 0
        %1082 = vmatpush.bf16.msra.mxu0 0
        %1083 = vmatpush.bf16.msra.mxu0 0
        %1084 = vmatpush.bf16.msra.mxu0 0
        %1085 = vmatpush.bf16.msra.mxu0 0
        %1086 = vmatpush.bf16.msra.mxu0 0
        %1087 = vmatpush.bf16.msra.mxu0 0
        %1088 = vmatpush.bf16.msra.mxu0 %v573
        %1089 = vmatpush.bf16.msra.mxu0 %v572
        %1090 = vmatmul.bf16.gmra.mxu0 %v1080
        %v1091 = vpop.f32.mrf.mxu0
        %v1092 = vadd.f32 %v748, %v1091
        %v1093 = vpop.f32.mrf.mxu0
        %1094 = vdwg.mxu0
        %v1095 = vpack.c.bf16 %v1092, %v1092
        %v1097 = vsel %vm631, %v1095, 0
        %1099 = vmatpush.bf16.xpose.msra.mxu0 0
        %1100 = vmatpush.bf16.xpose.msra.mxu0 0
        %1101 = vmatpush.bf16.xpose.msra.mxu0 0
        %1102 = vmatpush.bf16.xpose.msra.mxu0 0
        %1103 = vmatpush.bf16.xpose.msra.mxu0 0
        %1104 = vmatpush.bf16.xpose.msra.mxu0 0
        %1105 = vmatpush.bf16.xpose.msra.mxu0 0
        %1106 = vmatpush.bf16.xpose.msra.mxu0 %v776
        %1107 = vmatmul.bf16.gmra.mxu0 %v1097
        %v1108 = vpop.f32.mrf.mxu0
        %v1109 = vadd.f32 0.0, %v1108
        %v1110 = vpop.f32.mrf.mxu0
        %1111 = vdwg.mxu0
        %v1112 = vsel %vm791, %v1109, -inf
        %v1113 = vrot.slane %v1112, 4
        %v1114 = vmax.f32 %v1112, %v1113
        %v1115 = vrot.slane %v1114, 2
        %v1116 = vmax.f32 %v1114, %v1115
        %v1117 = vrot.slane %v1116, 1
        %v1118 = vmax.f32 %v1116, %v1117
        %v1119 = vsub.f32 %v1109, %v1118
        %v1120 = vmul.f32 %v1119, 1.442695
        %v1121 = vpow.pop %v1120
        %v1122 = vsel %vm791, %v1121, 0.0
        %v1123 = vrot.slane %v1122, 4
        %v1124 = vadd.f32 %v1122, %v1123
        %v1125 = vrot.slane %v1124, 2
        %v1126 = vadd.f32 %v1124, %v1125
        %v1127 = vrot.slane %v1126, 1
        %v1128 = vadd.f32 %v1126, %v1127
        %v1129 = vrcp.pop %v1128
        %v1130 = vmul.f32 %v1128, %v1129
        %v1131 = vsub.f32 1.0, %v1130
        %v1132 = vmul.f32 %v1129, %v1131
        %v1133 = vadd.f32 %v1129, %v1132
        %vm1134 = vweird.f32 %v1128
        %vm1135 = vweird.f32 %v1129
        %vm1136 = vmor %vm1134, %vm1135
        %v1137 = vsel %vm1136, %v1129, %v1133
        %v1138 = vand.u32 2147483647, %v1128
        %vm1139 = vcmp.eq.f32.partialorder %v1138, 8.507059e+37
        %v1140 = vand.u32 %v1128, 2147483648
        %v1141 = vor.u32 1.1754944e-38, %v1140
        %v1142 = vsel %vm1139, %v1141, %v1137
        %v1143 = vmul.f32 %v1121, %v1142
        %v1144 = vadd.f32 %v1143, 1e-08
        %v1145 = vsel %vm791, %v1144, 0.0
        %1146 = vadd.xlane.f32.xlu0 %v1145
        %v1147 = vpop.xlane.xlu0 %1146
        %v1148 = vrcp.pop %v1147
        %v1149 = vmul.f32 %v1147, %v1148
        %v1150 = vsub.f32 1.0, %v1149
        %v1151 = vmul.f32 %v1148, %v1150
        %v1152 = vadd.f32 %v1148, %v1151
        %vm1153 = vweird.f32 %v1147
        %vm1154 = vweird.f32 %v1148
        %vm1155 = vmor %vm1153, %vm1154
        %v1156 = vsel %vm1155, %v1148, %v1152
        %v1157 = vand.u32 2147483647, %v1147
        %vm1158 = vcmp.eq.f32.partialorder %v1157, 8.507059e+37
        %v1159 = vand.u32 %v1147, 2147483648
        %v1160 = vor.u32 1.1754944e-38, %v1159
        %v1161 = vsel %vm1158, %v1160, %v1156
        %v1162 = vmul.f32 %v1144, %v1161
        %v1163 = vpack.c.bf16 %v1162, %v1162
        %v1165 = vsel %vm791, %v1163, 0
        %1167 = vmatpush.bf16.msra.mxu0 0
        %1168 = vmatpush.bf16.msra.mxu0 0
        %1169 = vmatpush.bf16.msra.mxu0 0
        %1170 = vmatpush.bf16.msra.mxu0 0
        %1171 = vmatpush.bf16.msra.mxu0 0
        %1172 = vmatpush.bf16.msra.mxu0 0
        %1173 = vmatpush.bf16.msra.mxu0 0
        %1174 = vmatpush.bf16.msra.mxu0 %v845
        %1175 = vmatmul.bf16.gmra.mxu0 %v1165
        %v1176 = vpop.f32.mrf.mxu0
        %v1177 = vadd.f32 0.0, %v1176
        %v1178 = vpop.f32.mrf.mxu0
        %1179 = vdwg.mxu0
        %v1180 = vsel %vm631, %v1177, %v1034
        %v1181 = vpack.c.bf16 %v1180, %v1180
        %v1183 = vsel %vm872, %v1181, 0
        %1185 = vmatpush.bf16.msra.mxu0 0
        %1186 = vmatpush.bf16.msra.mxu0 0
        %1187 = vmatpush.bf16.msra.mxu0 0
        %1188 = vmatpush.bf16.msra.mxu0 0
        %1189 = vmatpush.bf16.msra.mxu0 %v585
        %1190 = vmatpush.bf16.msra.mxu0 %v584
        %1191 = vmatpush.bf16.msra.mxu0 %v583
        %1192 = vmatpush.bf16.msra.mxu0 %v582
        %1193 = vmatmul.bf16.gmra.mxu0 %v1183
        %v1194 = vpop.f32.mrf.mxu0
        %v1195 = vadd.f32 %v870, %v1194
        %v1196 = vpop.f32.mrf.mxu0
        %1197 = vdwg.mxu0
        %v1198 = vpack.c.bf16 %v1034, %v1034
        %1200 = vrot.lane.b32.xlu0 %v1198, 96
        %v1201 = vpop.permute.xlu0 %1200
        %v1203 = vsel %vm631, %v1201, 0
        %1205 = vmatpush.bf16.msra.mxu0 0
        %1206 = vmatpush.bf16.msra.mxu0 0
        %1207 = vmatpush.bf16.msra.mxu0 0
        %1208 = vmatpush.bf16.msra.mxu0 0
        %1209 = vmatpush.bf16.msra.mxu0 0
        %1210 = vmatpush.bf16.msra.mxu0 0
        %1211 = vmatpush.bf16.msra.mxu0 %v591
        %1212 = vmatpush.bf16.msra.mxu0 %v590
        %1213 = vmatmul.bf16.gmra.mxu0 %v1203
        %v1214 = vpop.f32.mrf.mxu0
        %v1215 = vadd.f32 %v891, %v1214
        %v1216 = vpop.f32.mrf.mxu0
        %1217 = vdwg.mxu0
        %v1218 = vxor.u32 %v1195, 2147483648
        %v1219 = vmul.f32 %v1218, 1.442695
        %v1220 = vpow.pop %v1219
        %v1221 = vadd.f32 %v1220, 1.0
        %v1222 = vrcp.pop %v1221
        %v1223 = vmul.f32 %v1221, %v1222
        %v1224 = vsub.f32 1.0, %v1223
        %v1225 = vmul.f32 %v1222, %v1224
        %v1226 = vadd.f32 %v1222, %v1225
        %vm1227 = vweird.f32 %v1221
        %vm1228 = vweird.f32 %v1222
        %vm1229 = vmor %vm1227, %vm1228
        %v1230 = vsel %vm1229, %v1222, %v1226
        %v1231 = vand.u32 2147483647, %v1221
        %vm1232 = vcmp.eq.f32.partialorder %v1231, 8.507059e+37
        %v1233 = vand.u32 %v1221, 2147483648
        %v1234 = vor.u32 1.1754944e-38, %v1233
        %v1235 = vsel %vm1232, %v1234, %v1230
        %v1236 = vmul.f32 1.0, %v1235
        %v1237 = vsub.f32 %v1236, 1.0
        %v1238 = vmul.f32 %v1237, %v1215
        %1240 = vrot.lane.b32.xlu0 %v1238, 64
        %v1241 = vpop.permute.xlu0 %1240
        %v1243 = vadd.f32 %v1195, %v1241
        %v1244 = vtanh.pop %v1243
        %v1245 = vsub.f32 1.0, %v1236
        %1247 = vrot.lane.b32.xlu0 %v1244, 96
        %v1248 = vpop.permute.xlu0 %1247
        %v1250 = vmul.f32 %v1245, %v1248
        %v1251 = vmul.f32 %v1236, %v1034
        %v1252 = vadd.f32 %v1250, %v1251
        %1254 = vrot.lane.b32.xlu0 %v1252, 96
        %v1255 = vpop.permute.xlu0 %1254
        %v1257 = vsel %vm631, %v1255, 0.0
        %1258 = vadd.xlane.f32.xlu0 %v1257
        %v1259 = vpop.xlane.xlu0 %1258
        %v1260 = vmul.f32 %v1259, %v644
        %v1261 = vsub.f32 %v1252, %v1260
        %v1262 = vmul.f32 %v1261, %v1261
        %1264 = vrot.lane.b32.xlu0 %v1262, 96
        %v1265 = vpop.permute.xlu0 %1264
        %v1267 = vsel %vm631, %v1265, 0.0
        %1268 = vadd.xlane.f32.xlu0 %v1267
        %v1269 = vpop.xlane.xlu0 %1268
        %v1270 = vmul.f32 %v1269, %v644
        %v1271 = vadd.f32 %v1270, 1e-05
        %v1272 = vrsqrt.pop %v1271
        %v1273 = vmul.f32 %v1272, %v1271
        %v1274 = vmul.f32 %v1273, %v1272
        %v1275 = vmul.f32 0.5, %v1274
        %v1276 = vsub.f32 1.5, %v1275
        %v1277 = vmul.f32 %v1272, %v1276
        %vm1278 = vweird.f32 %v1271
        %vm1279 = vweird.f32 %v1272
        %vm1280 = vmor %vm1278, %vm1279
        %v1281 = vsel %vm1280, %v1272, %v1277
        %v1282 = vmul.f32 %v1261, %v1281
        %v1283 = vmul.f32 %v1282, %v977
        %v1284 = vadd.f32 %v1283, %v983
        %v1285 = vpack.c.bf16 %v1284, %v1284
        %1287 = vrot.lane.b32.xlu0 %v1285, 96
        %v1288 = vpop.permute.xlu0 %1287
        %v1290 = vsel %vm631, %v1288, 0
        %1292 = vmatpush.bf16.msra.mxu0 0
        %1293 = vmatpush.bf16.msra.mxu0 0
        %1294 = vmatpush.bf16.msra.mxu0 0
        %1295 = vmatpush.bf16.msra.mxu0 0
        %1296 = vmatpush.bf16.msra.mxu0 0
        %1297 = vmatpush.bf16.msra.mxu0 0
        %1298 = vmatpush.bf16.msra.mxu0 %v597
        %1299 = vmatpush.bf16.msra.mxu0 %v596
        %1300 = vmatmul.bf16.gmra.mxu0 %v1290
        %v1301 = vpop.f32.mrf.mxu0
        %v1302 = vadd.f32 %v988, %v1301
        %v1303 = vpop.f32.mrf.mxu0
        %1304 = vdwg.mxu0
        %v1305 = vmax.f32 %v1302, 0.0
        %v1306 = vpack.c.bf16 %v1305, %v1305
        %1307 = vmatpush.bf16.msra.mxu0 %v621
        %1308 = vmatpush.bf16.msra.mxu0 %v620
        %1309 = vmatpush.bf16.msra.mxu0 %v619
        %1310 = vmatpush.bf16.msra.mxu0 %v618
        %1311 = vmatpush.bf16.msra.mxu0 %v617
        %1312 = vmatpush.bf16.msra.mxu0 %v616
        %1313 = vmatpush.bf16.msra.mxu0 %v615
        %1314 = vmatpush.bf16.msra.mxu0 %v614
        %1315 = vmatmul.bf16.gmra.mxu0 %v1306
        %v1316 = vpop.f32.mrf.mxu0
        %v1317 = vadd.f32 0.0, %v1316
        %v1318 = vpop.f32.mrf.mxu0
        %1319 = vdwg.mxu0
        %1321 = vrot.lane.b32.xlu0 %v1317, 32
        %v1322 = vpop.permute.xlu0 %1321
        %v1324 = vadd.f32 %v1252, %v1322
        %v1325 = vadd.f32 %v1324, %v1032
        %1327 = vrot.lane.b32.xlu0 %v1325, 96
        %v1328 = vpop.permute.xlu0 %1327
        %v1330 = vsel %vm631, %v1328, 0.0
        %1331 = vadd.xlane.f32.xlu0 %v1330
        %v1332 = vpop.xlane.xlu0 %1331
        %v1333 = vmul.f32 %v1332, %v644
        %v1334 = vsub.f32 %v1325, %v1333
        %v1335 = vmul.f32 %v1334, %v1334
        %1337 = vrot.lane.b32.xlu0 %v1335, 96
        %v1338 = vpop.permute.xlu0 %1337
        %v1340 = vsel %vm631, %v1338, 0.0
        %1341 = vadd.xlane.f32.xlu0 %v1340
        %v1342 = vpop.xlane.xlu0 %1341
        %v1343 = vmul.f32 %v1342, %v644
        %v1344 = vadd.f32 %v1343, 1e-05
        %v1345 = vrsqrt.pop %v1344
        %v1346 = vmul.f32 %v1345, %v1344
        %v1347 = vmul.f32 %v1346, %v1345
        %v1348 = vmul.f32 0.5, %v1347
        %v1349 = vsub.f32 1.5, %v1348
        %v1350 = vmul.f32 %v1345, %v1349
        %vm1351 = vweird.f32 %v1344
        %vm1352 = vweird.f32 %v1345
        %vm1353 = vmor %vm1351, %vm1352
        %v1354 = vsel %vm1353, %v1345, %v1350
        %v1355 = vmul.f32 %v1334, %v1354
        %v1356 = vmul.f32 %v1355, %v1067
        %v1357 = vadd.f32 %v1356, %v1072
        %v1358 = vpack.c.bf16 %v1357, %v1357
        %1360 = vrot.lane.b32.xlu0 %v1358, 96
        %v1361 = vpop.permute.xlu0 %1360
        %v1363 = vsel %vm631, %v1361, 0
        %1365 = vmatpush.bf16.msra.mxu0 0
        %1366 = vmatpush.bf16.msra.mxu0 0
        %1367 = vmatpush.bf16.msra.mxu0 0
        %1368 = vmatpush.bf16.msra.mxu0 0
        %1369 = vmatpush.bf16.msra.mxu0 0
        %1370 = vmatpush.bf16.msra.mxu0 0
        %1371 = vmatpush.bf16.msra.mxu0 %v573
        %1372 = vmatpush.bf16.msra.mxu0 %v572
        %1373 = vmatmul.bf16.gmra.mxu0 %v1363
        %v1374 = vpop.f32.mrf.mxu0
        %v1375 = vadd.f32 %v748, %v1374
        %v1376 = vpop.f32.mrf.mxu0
        %1377 = vdwg.mxu0
        %v1378 = vpack.c.bf16 %v1375, %v1375
        %v1380 = vsel %vm631, %v1378, 0
        %1382 = vmatpush.bf16.xpose.msra.mxu0 0
        %1383 = vmatpush.bf16.xpose.msra.mxu0 0
        %1384 = vmatpush.bf16.xpose.msra.mxu0 0
        %1385 = vmatpush.bf16.xpose.msra.mxu0 0
        %1386 = vmatpush.bf16.xpose.msra.mxu0 0
        %1387 = vmatpush.bf16.xpose.msra.mxu0 0
        %1388 = vmatpush.bf16.xpose.msra.mxu0 0
        %1389 = vmatpush.bf16.xpose.msra.mxu0 %v776
        %1390 = vmatmul.bf16.gmra.mxu0 %v1380
        %v1391 = vpop.f32.mrf.mxu0
        %v1392 = vadd.f32 0.0, %v1391
        %v1393 = vpop.f32.mrf.mxu0
        %1394 = vdwg.mxu0
        %v1395 = vsel %vm791, %v1392, -inf
        %v1396 = vrot.slane %v1395, 4
        %v1397 = vmax.f32 %v1395, %v1396
        %v1398 = vrot.slane %v1397, 2
        %v1399 = vmax.f32 %v1397, %v1398
        %v1400 = vrot.slane %v1399, 1
        %v1401 = vmax.f32 %v1399, %v1400
        %v1402 = vsub.f32 %v1392, %v1401
        %v1403 = vmul.f32 %v1402, 1.442695
        %v1404 = vpow.pop %v1403
        %v1405 = vsel %vm791, %v1404, 0.0
        %v1406 = vrot.slane %v1405, 4
        %v1407 = vadd.f32 %v1405, %v1406
        %v1408 = vrot.slane %v1407, 2
        %v1409 = vadd.f32 %v1407, %v1408
        %v1410 = vrot.slane %v1409, 1
        %v1411 = vadd.f32 %v1409, %v1410
        %v1412 = vrcp.pop %v1411
        %v1413 = vmul.f32 %v1411, %v1412
        %v1414 = vsub.f32 1.0, %v1413
        %v1415 = vmul.f32 %v1412, %v1414
        %v1416 = vadd.f32 %v1412, %v1415
        %vm1417 = vweird.f32 %v1411
        %vm1418 = vweird.f32 %v1412
        %vm1419 = vmor %vm1417, %vm1418
        %v1420 = vsel %vm1419, %v1412, %v1416
        %v1421 = vand.u32 2147483647, %v1411
        %vm1422 = vcmp.eq.f32.partialorder %v1421, 8.507059e+37
        %v1423 = vand.u32 %v1411, 2147483648
        %v1424 = vor.u32 1.1754944e-38, %v1423
        %v1425 = vsel %vm1422, %v1424, %v1420
        %v1426 = vmul.f32 %v1404, %v1425
        %v1427 = vadd.f32 %v1426, 1e-08
        %v1428 = vsel %vm791, %v1427, 0.0
        %1429 = vadd.xlane.f32.xlu0 %v1428
        %v1430 = vpop.xlane.xlu0 %1429
        %v1431 = vrcp.pop %v1430
        %v1432 = vmul.f32 %v1430, %v1431
        %v1433 = vsub.f32 1.0, %v1432
        %v1434 = vmul.f32 %v1431, %v1433
        %v1435 = vadd.f32 %v1431, %v1434
        %vm1436 = vweird.f32 %v1430
        %vm1437 = vweird.f32 %v1431
        %vm1438 = vmor %vm1436, %vm1437
        %v1439 = vsel %vm1438, %v1431, %v1435
        %v1440 = vand.u32 2147483647, %v1430
        %vm1441 = vcmp.eq.f32.partialorder %v1440, 8.507059e+37
        %v1442 = vand.u32 %v1430, 2147483648
        %v1443 = vor.u32 1.1754944e-38, %v1442
        %v1444 = vsel %vm1441, %v1443, %v1439
        %v1445 = vmul.f32 %v1427, %v1444
        %v1446 = vpack.c.bf16 %v1445, %v1445
        %v1448 = vsel %vm791, %v1446, 0
        %1450 = vmatpush.bf16.msra.mxu0 0
        %1451 = vmatpush.bf16.msra.mxu0 0
        %1452 = vmatpush.bf16.msra.mxu0 0
        %1453 = vmatpush.bf16.msra.mxu0 0
        %1454 = vmatpush.bf16.msra.mxu0 0
        %1455 = vmatpush.bf16.msra.mxu0 0
        %1456 = vmatpush.bf16.msra.mxu0 0
        %1457 = vmatpush.bf16.msra.mxu0 %v845
        %1458 = vmatmul.bf16.gmra.mxu0 %v1448
        %v1459 = vpop.f32.mrf.mxu0
        %v1460 = vadd.f32 0.0, %v1459
        %v1461 = vpop.f32.mrf.mxu0
        %1462 = vdwg.mxu0
        %v1463 = vsel %vm631, %v1460, %v1325
        %v1464 = vpack.c.bf16 %v1463, %v1463
        %v1466 = vsel %vm872, %v1464, 0
        %1468 = vmatpush.bf16.msra.mxu0 0
        %1469 = vmatpush.bf16.msra.mxu0 0
        %1470 = vmatpush.bf16.msra.mxu0 0
        %1471 = vmatpush.bf16.msra.mxu0 0
        %1472 = vmatpush.bf16.msra.mxu0 %v585
        %1473 = vmatpush.bf16.msra.mxu0 %v584
        %1474 = vmatpush.bf16.msra.mxu0 %v583
        %1475 = vmatpush.bf16.msra.mxu0 %v582
        %1476 = vmatmul.bf16.gmra.mxu0 %v1466
        %v1477 = vpop.f32.mrf.mxu0
        %v1478 = vadd.f32 %v870, %v1477
        %v1479 = vpop.f32.mrf.mxu0
        %1480 = vdwg.mxu0
        %v1481 = vpack.c.bf16 %v1325, %v1325
        %1483 = vrot.lane.b32.xlu0 %v1481, 96
        %v1484 = vpop.permute.xlu0 %1483
        %v1486 = vsel %vm631, %v1484, 0
        %1488 = vmatpush.bf16.msra.mxu0 0
        %1489 = vmatpush.bf16.msra.mxu0 0
        %1490 = vmatpush.bf16.msra.mxu0 0
        %1491 = vmatpush.bf16.msra.mxu0 0
        %1492 = vmatpush.bf16.msra.mxu0 0
        %1493 = vmatpush.bf16.msra.mxu0 0
        %1494 = vmatpush.bf16.msra.mxu0 %v591
        %1495 = vmatpush.bf16.msra.mxu0 %v590
        %1496 = vmatmul.bf16.gmra.mxu0 %v1486
        %v1497 = vpop.f32.mrf.mxu0
        %v1498 = vadd.f32 %v891, %v1497
        %v1499 = vpop.f32.mrf.mxu0
        %1500 = vdwg.mxu0
        %v1501 = vxor.u32 %v1478, 2147483648
        %v1502 = vmul.f32 %v1501, 1.442695
        %v1503 = vpow.pop %v1502
        %v1504 = vadd.f32 %v1503, 1.0
        %v1505 = vrcp.pop %v1504
        %v1506 = vmul.f32 %v1504, %v1505
        %v1507 = vsub.f32 1.0, %v1506
        %v1508 = vmul.f32 %v1505, %v1507
        %v1509 = vadd.f32 %v1505, %v1508
        %vm1510 = vweird.f32 %v1504
        %vm1511 = vweird.f32 %v1505
        %vm1512 = vmor %vm1510, %vm1511
        %v1513 = vsel %vm1512, %v1505, %v1509
        %v1514 = vand.u32 2147483647, %v1504
        %vm1515 = vcmp.eq.f32.partialorder %v1514, 8.507059e+37
        %v1516 = vand.u32 %v1504, 2147483648
        %v1517 = vor.u32 1.1754944e-38, %v1516
        %v1518 = vsel %vm1515, %v1517, %v1513
        %v1519 = vmul.f32 1.0, %v1518
        %v1520 = vsub.f32 %v1519, 1.0
        %v1521 = vmul.f32 %v1520, %v1498
        %1523 = vrot.lane.b32.xlu0 %v1521, 64
        %v1524 = vpop.permute.xlu0 %1523
        %v1526 = vadd.f32 %v1478, %v1524
        %v1527 = vtanh.pop %v1526
        %v1528 = vsub.f32 1.0, %v1519
        %1530 = vrot.lane.b32.xlu0 %v1527, 96
        %v1531 = vpop.permute.xlu0 %1530
        %v1533 = vmul.f32 %v1528, %v1531
        %v1534 = vmul.f32 %v1519, %v1325
        %v1535 = vadd.f32 %v1533, %v1534
        %1537 = vrot.lane.b32.xlu0 %v1535, 96
        %v1538 = vpop.permute.xlu0 %1537
        %v1540 = vsel %vm631, %v1538, 0.0
        %1541 = vadd.xlane.f32.xlu0 %v1540
        %v1542 = vpop.xlane.xlu0 %1541
        %v1543 = vmul.f32 %v1542, %v644
        %v1544 = vsub.f32 %v1535, %v1543
        %v1545 = vmul.f32 %v1544, %v1544
        %1547 = vrot.lane.b32.xlu0 %v1545, 96
        %v1548 = vpop.permute.xlu0 %1547
        %v1550 = vsel %vm631, %v1548, 0.0
        %1551 = vadd.xlane.f32.xlu0 %v1550
        %v1552 = vpop.xlane.xlu0 %1551
        %v1553 = vmul.f32 %v1552, %v644
        %v1554 = vadd.f32 %v1553, 1e-05
        %v1555 = vrsqrt.pop %v1554
        %v1556 = vmul.f32 %v1555, %v1554
        %v1557 = vmul.f32 %v1556, %v1555
        %v1558 = vmul.f32 0.5, %v1557
        %v1559 = vsub.f32 1.5, %v1558
        %v1560 = vmul.f32 %v1555, %v1559
        %vm1561 = vweird.f32 %v1554
        %vm1562 = vweird.f32 %v1555
        %vm1563 = vmor %vm1561, %vm1562
        %v1564 = vsel %vm1563, %v1555, %v1560
        %v1565 = vmul.f32 %v1544, %v1564
        %v1566 = vmul.f32 %v1565, %v977
        %v1567 = vadd.f32 %v1566, %v983
        %v1568 = vpack.c.bf16 %v1567, %v1567
        %1570 = vrot.lane.b32.xlu0 %v1568, 96
        %v1571 = vpop.permute.xlu0 %1570
        %v1573 = vsel %vm631, %v1571, 0
        %1575 = vmatpush.bf16.msra.mxu0 0
        %1576 = vmatpush.bf16.msra.mxu0 0
        %1577 = vmatpush.bf16.msra.mxu0 0
        %1578 = vmatpush.bf16.msra.mxu0 0
        %1579 = vmatpush.bf16.msra.mxu0 0
        %1580 = vmatpush.bf16.msra.mxu0 0
        %1581 = vmatpush.bf16.msra.mxu0 %v597
        %1582 = vmatpush.bf16.msra.mxu0 %v596
        %1583 = vmatmul.bf16.gmra.mxu0 %v1573
        %v1584 = vpop.f32.mrf.mxu0
        %v1585 = vadd.f32 %v988, %v1584
        %v1586 = vpop.f32.mrf.mxu0
        %1587 = vdwg.mxu0
        %v1588 = vmax.f32 %v1585, 0.0
        %v1589 = vpack.c.bf16 %v1588, %v1588
        %1590 = vmatpush.bf16.msra.mxu0 %v621
        %1591 = vmatpush.bf16.msra.mxu0 %v620
        %1592 = vmatpush.bf16.msra.mxu0 %v619
        %1593 = vmatpush.bf16.msra.mxu0 %v618
        %1594 = vmatpush.bf16.msra.mxu0 %v617
        %1595 = vmatpush.bf16.msra.mxu0 %v616
        %1596 = vmatpush.bf16.msra.mxu0 %v615
        %1597 = vmatpush.bf16.msra.mxu0 %v614
        %1598 = vmatmul.bf16.gmra.mxu0 %v1589
        %v1599 = vpop.f32.mrf.mxu0
        %v1600 = vadd.f32 0.0, %v1599
        %v1601 = vpop.f32.mrf.mxu0
        %1602 = vdwg.mxu0
        %1604 = vrot.lane.b32.xlu0 %v1600, 32
        %v1605 = vpop.permute.xlu0 %1604
        %v1607 = vadd.f32 %v1535, %v1605
        %v1608 = vadd.f32 %v1607, %v1032
        %1610 = vrot.lane.b32.xlu0 %v1608, 96
        %v1611 = vpop.permute.xlu0 %1610
        %1613 = vst.msk [vmem:[%s560] sm:$0xff] %vm631, %v1611
        %s1614 = sand.u32 %s362, 1
        %s1615 = scalar_lea.sflag [#allocation4], %s1614
        %s1616 = sand.u32 %s362, 1
        %s1617 = smul.addr %s1616, 8
        %s1618 = scalar_lea.vmem [#allocation10], %s1617
        // Predicated region
        $region97: #{tpu_custom_call.1} parent=79 // pred_check
          %p1619 = pneg %p372
        $region98: #{tpu_custom_call.1} parent=79 // pred_check_branch
          %1621 = sbr.rel (%p1619) target = $region100
        $region99: #{tpu_custom_call.1} parent=79 // pred_region
          %1623 = vsyncadd %s1615, 0
          %s1624 = smul.addr %s34, 8
          %s1625 = scalar_lea.hbm %s15, %s1624
          %s1627 = sshll.u32 %s1618, 4
          %s1628 = int_to_ptr.vmem [resolvable:$true] %s1627
          %s1629 = sshll.u32 %s1625, 4
          %s1630 = int_to_ptr.hbm [resolvable:$true] %s1629
          %1632 = dma.vmem_to_hbm [thread:$0]  %s1628, 128, %s1630, %s1615
        $region100: #{tpu_custom_call.1} parent=79 // pred_fallthru
          _
      $region80: #{tpu_custom_call.1} parent=5 // pred_fallthru
        _
      %p1633 = scmp.le.s32.totalorder 2, %s29
      // Predicated region
      $region101: #{tpu_custom_call.1} parent=5 // pred_check
        %p1634 = pneg %p1633
      $region102: #{tpu_custom_call.1} parent=5 // pred_check_branch
        %1636 = sbr.rel (%p1634) target = $region104
      $region103: #{tpu_custom_call.1} parent=5 // pred_region
        %s1637 = ssub.s32 %s29, 2
        // Predicated region
        $region105: #{tpu_custom_call.1} parent=103 // pred_check
          %p1638 = pneg %p378
        $region106: #{tpu_custom_call.1} parent=103 // pred_check_branch
          %1640 = sbr.rel (%p1638) target = $region108
        $region107: #{tpu_custom_call.1} parent=103 // pred_region
          %s1641 = sand.u32 %s363, 1
          %s1642 = scalar_lea.sflag [#allocation4], %s1641
          %s1643 = sand.u32 %s363, 1
          %s1644 = smul.addr %s1643, 8
          %s1645 = scalar_lea.vmem [#allocation10], %s1644
          %1647 = dma.done %s1642, 128
        $region108: #{tpu_custom_call.1} parent=103 // pred_fallthru
          _
      $region104: #{tpu_custom_call.1} parent=5 // pred_fallthru
        _
    $region6: #{tpu_custom_call.1} parent=1 // loop_footer
      %s33 = sadd.s32 1, %s29
    $region7: #{tpu_custom_call.1} parent=1 // loop_footer_branch
      %28 = sbr.rel target = $region3
    $region8: #{tpu_custom_call.1} parent=1 // loop_exit
      _
    %1648 = vsyncpa [#allocation3], 1
    %s1649 = scalar_lea.sflag [#allocation3], 1
    %1650 = vsyncpa %s1649, 1
    %1651 = vsyncpa [#allocation6], 1
    %1652 = vsyncpa [#allocation9], 1
    %1653 = vsyncpa [#allocation4], 1
    %s1654 = scalar_lea.sflag [#allocation4], 1
    %1655 = vsyncpa %s1654, 1

</llo_original>
